<compile_context>
chip_gen: v5e
topology: v5e:2x2
jax: 0.10.0
libtpu: 0.0.40
codegen_flags: <defaults>
</compile_context>

<pallas_src>
import functools
import math

import jax
import jax.numpy as jnp
from jax import lax
from jax.experimental import pallas as pl
from jax.experimental.pallas import tpu as pltpu


def mha_flash_kernel(q_ref, k_ref, v_ref,
                     wq_ref, wk_ref, wv_ref, wo_ref,
                     bq_ref, bk_ref, bv_ref, bo_ref,
                     gamma_ref, beta_ref,
                     o_ref,
                     q_sc, kh_sc, vh_sc, m_sc, l_sc, acc_sc,
                     *, num_heads, head_dim, eps, scale):
    H, Dh = num_heads, head_dim
    ki = pl.program_id(2)
    nk = pl.num_programs(2)

    # ---- once per (batch, q-tile): project Q (bf16 MXU, f32 accum), split it
    # head-major into scratch, and reset the online-softmax running state. ----
    @pl.when(ki == 0)
    def _init():
        xq = q_ref[0].astype(jnp.bfloat16)                          # (Tq, E)
        qp = (jnp.dot(xq, wq_ref[...], preferred_element_type=jnp.float32)
              + bq_ref[...]) * scale                                # fold 1/sqrt(Dh)
        qp = qp.astype(jnp.bfloat16)
        for h in range(H):                                          # static head split
            q_sc[h] = qp[:, h * Dh:(h + 1) * Dh]
        m_sc[...] = jnp.full(m_sc.shape, -jnp.inf, jnp.float32)
        l_sc[...] = jnp.zeros(l_sc.shape, jnp.float32)
        acc_sc[...] = jnp.zeros(acc_sc.shape, jnp.float32)

    # ---- every (q-tile, kv-tile) step: project this KV tile and fold it into
    # the running softmax (flash-style).  bf16 MXU operands, f32 state. -------
    xk = k_ref[0].astype(jnp.bfloat16)                              # (Tk, E)
    xv = v_ref[0].astype(jnp.bfloat16)
    kp = (jnp.dot(xk, wk_ref[...], preferred_element_type=jnp.float32)
          + bk_ref[...]).astype(jnp.bfloat16)                       # (Tk, E)
    vp = (jnp.dot(xv, wv_ref[...], preferred_element_type=jnp.float32)
          + bv_ref[...]).astype(jnp.bfloat16)                       # (Tk, E)
    for h in range(H):                                              # static head split
        kh_sc[h] = kp[:, h * Dh:(h + 1) * Dh]
        vh_sc[h] = vp[:, h * Dh:(h + 1) * Dh]

    # Batched-over-heads scores; RHS consumed in native orientation (no .T).
    s = jnp.einsum("hqd,hkd->hqk", q_sc[...], kh_sc[...],
                   preferred_element_type=jnp.float32)              # (H, Tq, Tk)
    # TODO(synk): optional boolean attention mask would be applied to `s` here.

    m_prev = m_sc[...]                                              # (H, Tq, 1)
    m_new = jnp.maximum(m_prev, jnp.max(s, axis=-1, keepdims=True))
    alpha = jnp.exp(m_prev - m_new)
    p = jnp.exp(s - m_new)                                          # (H, Tq, Tk)
    l_sc[...] = alpha * l_sc[...] + jnp.sum(p, axis=-1, keepdims=True)
    acc_sc[...] = alpha * acc_sc[...] + jnp.einsum(
        "hqk,hkd->hqd", p.astype(jnp.bfloat16), vh_sc[...],
        preferred_element_type=jnp.float32)                         # (H, Tq, Dh)
    m_sc[...] = m_new

    # ---- last KV tile: finish softmax, output projection, residual, LN. ----
    @pl.when(ki == nk - 1)
    def _finalize():
        inv_l = pl.reciprocal(l_sc[...], approx=True)               # EUP slot
        attn = (acc_sc[...] * inv_l).astype(jnp.bfloat16)           # (H, Tq, Dh)
        out = bo_ref[...].astype(jnp.float32)                       # (1, E)
        for h in range(H):                                          # static; accumulate
            out = out + jnp.dot(attn[h], wo_ref[h],
                                preferred_element_type=jnp.float32)  # (Tq, E)
        y = q_ref[0].astype(jnp.float32) + out                      # residual
        mean = jnp.mean(y, axis=-1, keepdims=True)
        var = jnp.mean(jnp.square(y - mean), axis=-1, keepdims=True)
        y = (y - mean) * lax.rsqrt(var + eps)
        o_ref[0] = (y * gamma_ref[...] + beta_ref[...]).astype(o_ref.dtype)


def _vmem_bytes_estimate(E, H, Dh, Tq, Tk):
    """Rough (padded, double-buffered) VMEM footprint of one grid step."""
    rup = lambda n, m: ((n + m - 1) // m) * m
    lane = lambda n: rup(max(n, 1), 128)
    sub = lambda n: rup(max(n, 1), 8)
    f32, bf16 = 4, 2
    acts = 2 * (2 * sub(Tq) + 2 * sub(Tk)) * lane(E) * f32          # q,k,v in + out
    wts = 2 * (3 * sub(E) * lane(E) + H * sub(Dh) * lane(E)) * bf16
    vecs = 2 * 6 * sub(1) * lane(E) * f32
    scr = (H * sub(Tq) * lane(Dh) * (bf16 + f32)                    # q_sc + acc_sc
           + 2 * H * sub(Tk) * lane(Dh) * bf16                      # kh_sc, vh_sc
           + 2 * H * sub(Tq) * lane(1) * f32)                       # m_sc, l_sc
    return acts + wts + vecs + scr


def multi_head_attention(query, key, value, params, *, num_heads, mask=None,
                         eps=1e-5, q_tile=128, kv_tile=128):
    """query/key/value: (B, S, E) float32. Returns (B, S, E)."""
    if mask is not None:
        raise NotImplementedError("TODO(synk): attention mask not supported")
    B, S, E = query.shape
    assert E % num_heads == 0
    H = num_heads
    Dh = E // H
    Tq = min(q_tile, S)
    Tk = min(kv_tile, S)
    # TODO(synk): ragged S would need padding + masking of the last tiles.
    assert S % Tq == 0 and S % Tk == 0
    nq, nk = S // Tq, S // Tk

    bf16, f32 = jnp.bfloat16, jnp.float32

    # PyTorch Linear stores W as (out, in) with y = x @ W.T + b.
    # Q/K/V weights: packed (in=E, out=E), bf16 for the MXU.
    # Out-proj weight: head-major (H, Dh, E) so the finalize step can do
    #   out = sum_h attn[h] @ wo[h]   without re-packing heads.
    wq = params["wq"].T.astype(bf16)
    wk = params["wk"].T.astype(bf16)
    wv = params["wv"].T.astype(bf16)
    wo = params["wo"].T.reshape(H, Dh, E).astype(bf16)
    bq = params["bq"].reshape(1, E).astype(f32)
    bk = params["bk"].reshape(1, E).astype(f32)
    bv = params["bv"].reshape(1, E).astype(f32)
    bo = params["bo"].reshape(1, E).astype(f32)
    gamma = params["gamma"].reshape(1, E).astype(f32)
    beta = params["beta"].reshape(1, E).astype(f32)

    q_spec = pl.BlockSpec((1, Tq, E), lambda b, qi, ki: (b, qi, 0))
    kv_spec = pl.BlockSpec((1, Tk, E), lambda b, qi, ki: (b, ki, 0))
    w_spec = pl.BlockSpec((E, E), lambda b, qi, ki: (0, 0))
    wo_spec = pl.BlockSpec((H, Dh, E), lambda b, qi, ki: (0, 0, 0))
    vec_spec = pl.BlockSpec((1, E), lambda b, qi, ki: (0, 0))
    out_spec = pl.BlockSpec((1, Tq, E), lambda b, qi, ki: (b, qi, 0))

    kernel = functools.partial(mha_flash_kernel, num_heads=H, head_dim=Dh,
                               eps=eps, scale=1.0 / math.sqrt(Dh))

    # Only raise the scoped-VMEM limit when the footprint actually needs it.
    vmem_est = _vmem_bytes_estimate(E, H, Dh, Tq, Tk)
    vmem_limit = None
    if vmem_est > 16 * 1024 * 1024:
        vmem_limit = min(int(vmem_est * 1.25), 96 * 1024 * 1024)

    return pl.pallas_call(
        kernel,
        out_shape=jax.ShapeDtypeStruct((B, S, E), query.dtype),
        grid_spec=pltpu.PrefetchScalarGridSpec(
            num_scalar_prefetch=0,
            grid=(B, nq, nk),
            in_specs=[q_spec, kv_spec, kv_spec,
                      w_spec, w_spec, w_spec, wo_spec,
                      vec_spec, vec_spec, vec_spec, vec_spec,
                      vec_spec, vec_spec],
            out_specs=out_spec,
            scratch_shapes=[
                pltpu.VMEM((H, Tq, Dh), bf16),    # projected, pre-scaled Q
                pltpu.VMEM((H, Tk, Dh), bf16),    # head-major K for this tile
                pltpu.VMEM((H, Tk, Dh), bf16),    # head-major V for this tile
                pltpu.VMEM((H, Tq, 1), f32),      # running max m
                pltpu.VMEM((H, Tq, 1), f32),      # running denom l
                pltpu.VMEM((H, Tq, Dh), f32),     # running numerator acc
            ]),
        compiler_params=pltpu.CompilerParams(
            dimension_semantics=("parallel", "parallel", "arbitrary"),
            vmem_limit_bytes=vmem_limit),
    )(query, key, value, wq, wk, wv, wo, bq, bk, bv, bo, gamma, beta)


def reference_mha(query, key, value, params, *, num_heads, eps=1e-5):
    """Pure-JAX f32 reference mirroring the PyTorch forward (dropout = identity)."""
    B, S, E = query.shape
    Dh = E // num_heads

    def lin(x, w, b):
        return x @ w.T + b

    def heads(x):
        return x.reshape(B, S, num_heads, Dh).transpose(0, 2, 1, 3)

    Q = heads(lin(query, params["wq"], params["bq"]))
    K = heads(lin(key, params["wk"], params["bk"]))
    V = heads(lin(value, params["wv"], params["bv"]))
    scores = jnp.einsum("bhqd,bhkd->bhqk", Q, K) / math.sqrt(Dh)
    attn = jax.nn.softmax(scores, axis=-1)
    out = jnp.einsum("bhqk,bhkd->bhqd", attn, V)
    out = out.transpose(0, 2, 1, 3).reshape(B, S, E)
    out = lin(out, params["wo"], params["bo"])
    y = query + out
    mean = y.mean(-1, keepdims=True)
    var = ((y - mean) ** 2).mean(-1, keepdims=True)
    y_norm = (y - mean) / jnp.sqrt(var + eps)
    return y_norm * params["gamma"] + params["beta"]


def init_params(key, embed_dim):
    ks = jax.random.split(key, 8)
    scale = 1.0 / math.sqrt(embed_dim)
    return {
        "wq": jax.random.uniform(ks[0], (embed_dim, embed_dim), jnp.float32, -scale, scale),
        "bq": jax.random.uniform(ks[1], (embed_dim,), jnp.float32, -scale, scale),
        "wk": jax.random.uniform(ks[2], (embed_dim, embed_dim), jnp.float32, -scale, scale),
        "bk": jax.random.uniform(ks[3], (embed_dim,), jnp.float32, -scale, scale),
        "wv": jax.random.uniform(ks[4], (embed_dim, embed_dim), jnp.float32, -scale, scale),
        "bv": jax.random.uniform(ks[5], (embed_dim,), jnp.float32, -scale, scale),
        "wo": jax.random.uniform(ks[6], (embed_dim, embed_dim), jnp.float32, -scale, scale),
        "bo": jax.random.uniform(ks[7], (embed_dim,), jnp.float32, -scale, scale),
        "gamma": jnp.ones((embed_dim,), jnp.float32),
        "beta": jnp.zeros((embed_dim,), jnp.float32),
    }


if __name__ == "__main__":
    def run_case(B, S, E, H):
        root = jax.random.PRNGKey(0)
        kq, kk, kv, kp = jax.random.split(root, 4)
        q = jax.random.normal(kq, (B, S, E), jnp.float32)
        k = jax.random.normal(kk, (B, S, E), jnp.float32)
        v = jax.random.normal(kv, (B, S, E), jnp.float32)
        params = init_params(kp, E)
        out = jax.block_until_ready(
            multi_head_attention(q, k, v, params, num_heads=H))
        ref = reference_mha(q, k, v, params, num_heads=H)
        assert out.shape == (B, S, E)
        err = jnp.max(jnp.abs(out - ref))
        # bf16 MXU operands (f32 accumulation) vs f32 reference -> loose tol.
        assert jnp.allclose(out, ref, atol=2e-2, rtol=2e-2), f"max abs err {err}"

    # Small shape consistent with the module (single tile per axis).
    run_case(B=2, S=8, E=32, H=4)
    # Slightly larger shape exercising multiple query/KV tiles (online softmax).
    run_case(B=2, S=256, E=64, H=4)
    print("KERNEL_OK")
</pallas_src>

<mosaic_0001>
module attributes {stable_mosaic.version = 11 : i64} {
  func.func @mha_flash_kernel(%arg0: i32, %arg1: i32, %arg2: i32, %arg3: memref<1x8x32xf32, #tpu.memory_space<vmem>>, %arg4: memref<1x8x32xf32, #tpu.memory_space<vmem>>, %arg5: memref<1x8x32xf32, #tpu.memory_space<vmem>>, %arg6: memref<32x32xbf16, #tpu.memory_space<vmem>>, %arg7: memref<32x32xbf16, #tpu.memory_space<vmem>>, %arg8: memref<32x32xbf16, #tpu.memory_space<vmem>>, %arg9: memref<4x8x32xbf16, #tpu.memory_space<vmem>>, %arg10: memref<1x32xf32, #tpu.memory_space<vmem>>, %arg11: memref<1x32xf32, #tpu.memory_space<vmem>>, %arg12: memref<1x32xf32, #tpu.memory_space<vmem>>, %arg13: memref<1x32xf32, #tpu.memory_space<vmem>>, %arg14: memref<1x32xf32, #tpu.memory_space<vmem>>, %arg15: memref<1x32xf32, #tpu.memory_space<vmem>>, %arg16: memref<1x8x32xf32, #tpu.memory_space<vmem>>, %arg17: memref<4x8x8xbf16, #tpu.memory_space<vmem>>, %arg18: memref<4x8x8xbf16, #tpu.memory_space<vmem>>, %arg19: memref<4x8x8xbf16, #tpu.memory_space<vmem>>, %arg20: memref<4x8x1xf32, #tpu.memory_space<vmem>>, %arg21: memref<4x8x1xf32, #tpu.memory_space<vmem>>, %arg22: memref<4x8x8xf32, #tpu.memory_space<vmem>>) attributes {dimension_semantics = [#tpu.dimension_semantics<parallel>, #tpu.dimension_semantics<parallel>, #tpu.dimension_semantics<arbitrary>], iteration_bounds = array<i64: 2, 1, 1>, scalar_prefetch = 0 : i64, scratch_operands = 6 : i64, tpu.core_type = #tpu.core_type<tc>, window_params = [{transform_indices = @transform_0, window_bounds = array<i64: 1, 8, 32>}, {transform_indices = @transform_1, window_bounds = array<i64: 1, 8, 32>}, {transform_indices = @transform_2, window_bounds = array<i64: 1, 8, 32>}, {pipeline_mode = #tpu.pipeline_mode<synchronous>, transform_indices = @transform_3, window_bounds = array<i64: 32, 32>}, {pipeline_mode = #tpu.pipeline_mode<synchronous>, transform_indices = @transform_4, window_bounds = array<i64: 32, 32>}, {pipeline_mode = #tpu.pipeline_mode<synchronous>, transform_indices = @transform_5, window_bounds = array<i64: 32, 32>}, {pipeline_mode = #tpu.pipeline_mode<synchronous>, transform_indices = @transform_6, window_bounds = array<i64: 4, 8, 32>}, {pipeline_mode = #tpu.pipeline_mode<synchronous>, transform_indices = @transform_7, window_bounds = array<i64: 1, 32>}, {pipeline_mode = #tpu.pipeline_mode<synchronous>, transform_indices = @transform_8, window_bounds = array<i64: 1, 32>}, {pipeline_mode = #tpu.pipeline_mode<synchronous>, transform_indices = @transform_9, window_bounds = array<i64: 1, 32>}, {pipeline_mode = #tpu.pipeline_mode<synchronous>, transform_indices = @transform_10, window_bounds = array<i64: 1, 32>}, {pipeline_mode = #tpu.pipeline_mode<synchronous>, transform_indices = @transform_11, window_bounds = array<i64: 1, 32>}, {pipeline_mode = #tpu.pipeline_mode<synchronous>, transform_indices = @transform_12, window_bounds = array<i64: 1, 32>}, {transform_indices = @transform_13, window_bounds = array<i64: 1, 8, 32>}]} {
    %c0_i32 = arith.constant 0 : i32
    %0 = arith.cmpi eq, %arg2, %c0_i32 : i32
    %1 = arith.extui %0 : i1 to i32
    %c0_i32_0 = arith.constant 0 : i32
    %2 = arith.cmpi ne, %1, %c0_i32_0 : i32
    scf.if %2 {
      %c0_69 = arith.constant 0 : index
      %c0_70 = arith.constant 0 : index
      %c0_71 = arith.constant 0 : index
      %83 = vector.load %arg3[%c0_69, %c0_70, %c0_71] : memref<1x8x32xf32, #tpu.memory_space<vmem>>, vector<1x8x32xf32>
      %84 = vector.shape_cast %83 : vector<1x8x32xf32> to vector<8x32xf32>
      %85 = arith.truncf %84 : vector<8x32xf32> to vector<8x32xbf16>
      %c0_72 = arith.constant 0 : index
      %c0_73 = arith.constant 0 : index
      %86 = vector.load %arg6[%c0_72, %c0_73] : memref<32x32xbf16, #tpu.memory_space<vmem>>, vector<32x32xbf16>
      %cst_74 = arith.constant dense<0.000000e+00> : vector<8x32xf32>
      %87 = tpu.matmul %85, %86, %cst_74 {dimension_numbers = #tpu.dot_dimension_numbers<[1], [0], [0], [1], [0, 0, 1, 1], [], []>} : vector<8x32xbf16>, vector<32x32xbf16>, vector<8x32xf32> -> vector<8x32xf32>
      %c0_75 = arith.constant 0 : index
      %c0_76 = arith.constant 0 : index
      %88 = vector.load %arg10[%c0_75, %c0_76] : memref<1x32xf32, #tpu.memory_space<vmem>>, vector<1x32xf32>
      %89 = vector.broadcast %88 : vector<1x32xf32> to vector<8x32xf32>
      %90 = arith.addf %87, %89 : vector<8x32xf32>
      %cst_77 = arith.constant 0.353553385 : f32
      %91 = vector.broadcast %cst_77 : f32 to vector<8x32xf32>
      %92 = arith.mulf %90, %91 : vector<8x32xf32>
      %93 = arith.truncf %92 : vector<8x32xf32> to vector<8x32xbf16>
      %94 = vector.extract_strided_slice %93 {offsets = [0, 0], sizes = [8, 8], strides = [1, 1]} : vector<8x32xbf16> to vector<8x8xbf16>
      %c0_78 = arith.constant 0 : index
      %c0_79 = arith.constant 0 : index
      %c0_80 = arith.constant 0 : index
      %95 = vector.load %arg17[%c0_78, %c0_79, %c0_80] : memref<4x8x8xbf16, #tpu.memory_space<vmem>>, vector<1x8x8xbf16>
      %96 = vector.shape_cast %95 : vector<1x8x8xbf16> to vector<8x8xbf16>
      %97 = vector.shape_cast %94 : vector<8x8xbf16> to vector<1x8x8xbf16>
      tpu.vector_store %arg17[%c0_78, %c0_79, %c0_80], %97 {strides = array<i32>} : memref<4x8x8xbf16, #tpu.memory_space<vmem>>, vector<1x8x8xbf16>,
      %98 = vector.extract_strided_slice %93 {offsets = [0, 8], sizes = [8, 8], strides = [1, 1]} : vector<8x32xbf16> to vector<8x8xbf16>
      %c1_81 = arith.constant 1 : index
      %c0_82 = arith.constant 0 : index
      %c0_83 = arith.constant 0 : index
      %99 = vector.load %arg17[%c1_81, %c0_82, %c0_83] : memref<4x8x8xbf16, #tpu.memory_space<vmem>>, vector<1x8x8xbf16>
      %100 = vector.shape_cast %99 : vector<1x8x8xbf16> to vector<8x8xbf16>
      %101 = vector.shape_cast %98 : vector<8x8xbf16> to vector<1x8x8xbf16>
      tpu.vector_store %arg17[%c1_81, %c0_82, %c0_83], %101 {strides = array<i32>} : memref<4x8x8xbf16, #tpu.memory_space<vmem>>, vector<1x8x8xbf16>,
      %102 = vector.extract_strided_slice %93 {offsets = [0, 16], sizes = [8, 8], strides = [1, 1]} : vector<8x32xbf16> to vector<8x8xbf16>
      %c2_84 = arith.constant 2 : index
      %c0_85 = arith.constant 0 : index
      %c0_86 = arith.constant 0 : index
      %103 = vector.load %arg17[%c2_84, %c0_85, %c0_86] : memref<4x8x8xbf16, #tpu.memory_space<vmem>>, vector<1x8x8xbf16>
      %104 = vector.shape_cast %103 : vector<1x8x8xbf16> to vector<8x8xbf16>
      %105 = vector.shape_cast %102 : vector<8x8xbf16> to vector<1x8x8xbf16>
      tpu.vector_store %arg17[%c2_84, %c0_85, %c0_86], %105 {strides = array<i32>} : memref<4x8x8xbf16, #tpu.memory_space<vmem>>, vector<1x8x8xbf16>,
      %106 = vector.extract_strided_slice %93 {offsets = [0, 24], sizes = [8, 8], strides = [1, 1]} : vector<8x32xbf16> to vector<8x8xbf16>
      %c3_87 = arith.constant 3 : index
      %c0_88 = arith.constant 0 : index
      %c0_89 = arith.constant 0 : index
      %107 = vector.load %arg17[%c3_87, %c0_88, %c0_89] : memref<4x8x8xbf16, #tpu.memory_space<vmem>>, vector<1x8x8xbf16>
      %108 = vector.shape_cast %107 : vector<1x8x8xbf16> to vector<8x8xbf16>
      %109 = vector.shape_cast %106 : vector<8x8xbf16> to vector<1x8x8xbf16>
      tpu.vector_store %arg17[%c3_87, %c0_88, %c0_89], %109 {strides = array<i32>} : memref<4x8x8xbf16, #tpu.memory_space<vmem>>, vector<1x8x8xbf16>,
      %cst_90 = arith.constant 0xFF800000 : f32
      %110 = vector.broadcast %cst_90 : f32 to vector<4x8x1xf32>
      %c0_91 = arith.constant 0 : index
      %c0_92 = arith.constant 0 : index
      %c0_93 = arith.constant 0 : index
      %111 = vector.load %arg20[%c0_91, %c0_92, %c0_93] : memref<4x8x1xf32, #tpu.memory_space<vmem>>, vector<4x8x1xf32>
      tpu.vector_store %arg20[%c0_91, %c0_92, %c0_93], %110 {strides = array<i32>} : memref<4x8x1xf32, #tpu.memory_space<vmem>>, vector<4x8x1xf32>,
      %cst_94 = arith.constant 0.000000e+00 : f32
      %112 = vector.broadcast %cst_94 : f32 to vector<4x8x1xf32>
      %c0_95 = arith.constant 0 : index
      %c0_96 = arith.constant 0 : index
      %c0_97 = arith.constant 0 : index
      %113 = vector.load %arg21[%c0_95, %c0_96, %c0_97] : memref<4x8x1xf32, #tpu.memory_space<vmem>>, vector<4x8x1xf32>
      tpu.vector_store %arg21[%c0_95, %c0_96, %c0_97], %112 {strides = array<i32>} : memref<4x8x1xf32, #tpu.memory_space<vmem>>, vector<4x8x1xf32>,
      %cst_98 = arith.constant 0.000000e+00 : f32
      %114 = vector.broadcast %cst_98 : f32 to vector<4x8x8xf32>
      %c0_99 = arith.constant 0 : index
      %c0_100 = arith.constant 0 : index
      %c0_101 = arith.constant 0 : index
      %115 = vector.load %arg22[%c0_99, %c0_100, %c0_101] : memref<4x8x8xf32, #tpu.memory_space<vmem>>, vector<4x8x8xf32>
      tpu.vector_store %arg22[%c0_99, %c0_100, %c0_101], %114 {strides = array<i32>} : memref<4x8x8xf32, #tpu.memory_space<vmem>>, vector<4x8x8xf32>,
    } else {
    }
    %c0 = arith.constant 0 : index
    %c0_1 = arith.constant 0 : index
    %c0_2 = arith.constant 0 : index
    %3 = vector.load %arg4[%c0, %c0_1, %c0_2] : memref<1x8x32xf32, #tpu.memory_space<vmem>>, vector<1x8x32xf32>
    %4 = vector.shape_cast %3 : vector<1x8x32xf32> to vector<8x32xf32>
    %5 = arith.truncf %4 : vector<8x32xf32> to vector<8x32xbf16>
    %c0_3 = arith.constant 0 : index
    %c0_4 = arith.constant 0 : index
    %c0_5 = arith.constant 0 : index
    %6 = vector.load %arg5[%c0_3, %c0_4, %c0_5] : memref<1x8x32xf32, #tpu.memory_space<vmem>>, vector<1x8x32xf32>
    %7 = vector.shape_cast %6 : vector<1x8x32xf32> to vector<8x32xf32>
    %8 = arith.truncf %7 : vector<8x32xf32> to vector<8x32xbf16>
    %c0_6 = arith.constant 0 : index
    %c0_7 = arith.constant 0 : index
    %9 = vector.load %arg7[%c0_6, %c0_7] : memref<32x32xbf16, #tpu.memory_space<vmem>>, vector<32x32xbf16>
    %cst = arith.constant dense<0.000000e+00> : vector<8x32xf32>
    %10 = tpu.matmul %5, %9, %cst {dimension_numbers = #tpu.dot_dimension_numbers<[1], [0], [0], [1], [0, 0, 1, 1], [], []>} : vector<8x32xbf16>, vector<32x32xbf16>, vector<8x32xf32> -> vector<8x32xf32>
    %c0_8 = arith.constant 0 : index
    %c0_9 = arith.constant 0 : index
    %11 = vector.load %arg11[%c0_8, %c0_9] : memref<1x32xf32, #tpu.memory_space<vmem>>, vector<1x32xf32>
    %12 = vector.broadcast %11 : vector<1x32xf32> to vector<8x32xf32>
    %13 = arith.addf %10, %12 : vector<8x32xf32>
    %14 = arith.truncf %13 : vector<8x32xf32> to vector<8x32xbf16>
    %c0_10 = arith.constant 0 : index
    %c0_11 = arith.constant 0 : index
    %15 = vector.load %arg8[%c0_10, %c0_11] : memref<32x32xbf16, #tpu.memory_space<vmem>>, vector<32x32xbf16>
    %cst_12 = arith.constant dense<0.000000e+00> : vector<8x32xf32>
    %16 = tpu.matmul %8, %15, %cst_12 {dimension_numbers = #tpu.dot_dimension_numbers<[1], [0], [0], [1], [0, 0, 1, 1], [], []>} : vector<8x32xbf16>, vector<32x32xbf16>, vector<8x32xf32> -> vector<8x32xf32>
    %c0_13 = arith.constant 0 : index
    %c0_14 = arith.constant 0 : index
    %17 = vector.load %arg12[%c0_13, %c0_14] : memref<1x32xf32, #tpu.memory_space<vmem>>, vector<1x32xf32>
    %18 = vector.broadcast %17 : vector<1x32xf32> to vector<8x32xf32>
    %19 = arith.addf %16, %18 : vector<8x32xf32>
    %20 = arith.truncf %19 : vector<8x32xf32> to vector<8x32xbf16>
    %21 = vector.extract_strided_slice %14 {offsets = [0, 0], sizes = [8, 8], strides = [1, 1]} : vector<8x32xbf16> to vector<8x8xbf16>
    %c0_15 = arith.constant 0 : index
    %c0_16 = arith.constant 0 : index
    %c0_17 = arith.constant 0 : index
    %22 = vector.load %arg18[%c0_15, %c0_16, %c0_17] : memref<4x8x8xbf16, #tpu.memory_space<vmem>>, vector<1x8x8xbf16>
    %23 = vector.shape_cast %22 : vector<1x8x8xbf16> to vector<8x8xbf16>
    %24 = vector.shape_cast %21 : vector<8x8xbf16> to vector<1x8x8xbf16>
    tpu.vector_store %arg18[%c0_15, %c0_16, %c0_17], %24 {strides = array<i32>} : memref<4x8x8xbf16, #tpu.memory_space<vmem>>, vector<1x8x8xbf16>,
    %25 = vector.extract_strided_slice %20 {offsets = [0, 0], sizes = [8, 8], strides = [1, 1]} : vector<8x32xbf16> to vector<8x8xbf16>
    %c0_18 = arith.constant 0 : index
    %c0_19 = arith.constant 0 : index
    %c0_20 = arith.constant 0 : index
    %26 = vector.load %arg19[%c0_18, %c0_19, %c0_20] : memref<4x8x8xbf16, #tpu.memory_space<vmem>>, vector<1x8x8xbf16>
    %27 = vector.shape_cast %26 : vector<1x8x8xbf16> to vector<8x8xbf16>
    %28 = vector.shape_cast %25 : vector<8x8xbf16> to vector<1x8x8xbf16>
    tpu.vector_store %arg19[%c0_18, %c0_19, %c0_20], %28 {strides = array<i32>} : memref<4x8x8xbf16, #tpu.memory_space<vmem>>, vector<1x8x8xbf16>,
    %29 = vector.extract_strided_slice %14 {offsets = [0, 8], sizes = [8, 8], strides = [1, 1]} : vector<8x32xbf16> to vector<8x8xbf16>
    %c1 = arith.constant 1 : index
    %c0_21 = arith.constant 0 : index
    %c0_22 = arith.constant 0 : index
    %30 = vector.load %arg18[%c1, %c0_21, %c0_22] : memref<4x8x8xbf16, #tpu.memory_space<vmem>>, vector<1x8x8xbf16>
    %31 = vector.shape_cast %30 : vector<1x8x8xbf16> to vector<8x8xbf16>
    %32 = vector.shape_cast %29 : vector<8x8xbf16> to vector<1x8x8xbf16>
    tpu.vector_store %arg18[%c1, %c0_21, %c0_22], %32 {strides = array<i32>} : memref<4x8x8xbf16, #tpu.memory_space<vmem>>, vector<1x8x8xbf16>,
    %33 = vector.extract_strided_slice %20 {offsets = [0, 8], sizes = [8, 8], strides = [1, 1]} : vector<8x32xbf16> to vector<8x8xbf16>
    %c1_23 = arith.constant 1 : index
    %c0_24 = arith.constant 0 : index
    %c0_25 = arith.constant 0 : index
    %34 = vector.load %arg19[%c1_23, %c0_24, %c0_25] : memref<4x8x8xbf16, #tpu.memory_space<vmem>>, vector<1x8x8xbf16>
    %35 = vector.shape_cast %34 : vector<1x8x8xbf16> to vector<8x8xbf16>
    %36 = vector.shape_cast %33 : vector<8x8xbf16> to vector<1x8x8xbf16>
    tpu.vector_store %arg19[%c1_23, %c0_24, %c0_25], %36 {strides = array<i32>} : memref<4x8x8xbf16, #tpu.memory_space<vmem>>, vector<1x8x8xbf16>,
    %37 = vector.extract_strided_slice %14 {offsets = [0, 16], sizes = [8, 8], strides = [1, 1]} : vector<8x32xbf16> to vector<8x8xbf16>
    %c2 = arith.constant 2 : index
    %c0_26 = arith.constant 0 : index
    %c0_27 = arith.constant 0 : index
    %38 = vector.load %arg18[%c2, %c0_26, %c0_27] : memref<4x8x8xbf16, #tpu.memory_space<vmem>>, vector<1x8x8xbf16>
    %39 = vector.shape_cast %38 : vector<1x8x8xbf16> to vector<8x8xbf16>
    %40 = vector.shape_cast %37 : vector<8x8xbf16> to vector<1x8x8xbf16>
    tpu.vector_store %arg18[%c2, %c0_26, %c0_27], %40 {strides = array<i32>} : memref<4x8x8xbf16, #tpu.memory_space<vmem>>, vector<1x8x8xbf16>,
    %41 = vector.extract_strided_slice %20 {offsets = [0, 16], sizes = [8, 8], strides = [1, 1]} : vector<8x32xbf16> to vector<8x8xbf16>
    %c2_28 = arith.constant 2 : index
    %c0_29 = arith.constant 0 : index
    %c0_30 = arith.constant 0 : index
    %42 = vector.load %arg19[%c2_28, %c0_29, %c0_30] : memref<4x8x8xbf16, #tpu.memory_space<vmem>>, vector<1x8x8xbf16>
    %43 = vector.shape_cast %42 : vector<1x8x8xbf16> to vector<8x8xbf16>
    %44 = vector.shape_cast %41 : vector<8x8xbf16> to vector<1x8x8xbf16>
    tpu.vector_store %arg19[%c2_28, %c0_29, %c0_30], %44 {strides = array<i32>} : memref<4x8x8xbf16, #tpu.memory_space<vmem>>, vector<1x8x8xbf16>,
    %45 = vector.extract_strided_slice %14 {offsets = [0, 24], sizes = [8, 8], strides = [1, 1]} : vector<8x32xbf16> to vector<8x8xbf16>
    %c3 = arith.constant 3 : index
    %c0_31 = arith.constant 0 : index
    %c0_32 = arith.constant 0 : index
    %46 = vector.load %arg18[%c3, %c0_31, %c0_32] : memref<4x8x8xbf16, #tpu.memory_space<vmem>>, vector<1x8x8xbf16>
    %47 = vector.shape_cast %46 : vector<1x8x8xbf16> to vector<8x8xbf16>
    %48 = vector.shape_cast %45 : vector<8x8xbf16> to vector<1x8x8xbf16>
    tpu.vector_store %arg18[%c3, %c0_31, %c0_32], %48 {strides = array<i32>} : memref<4x8x8xbf16, #tpu.memory_space<vmem>>, vector<1x8x8xbf16>,
    %49 = vector.extract_strided_slice %20 {offsets = [0, 24], sizes = [8, 8], strides = [1, 1]} : vector<8x32xbf16> to vector<8x8xbf16>
    %c3_33 = arith.constant 3 : index
    %c0_34 = arith.constant 0 : index
    %c0_35 = arith.constant 0 : index
    %50 = vector.load %arg19[%c3_33, %c0_34, %c0_35] : memref<4x8x8xbf16, #tpu.memory_space<vmem>>, vector<1x8x8xbf16>
    %51 = vector.shape_cast %50 : vector<1x8x8xbf16> to vector<8x8xbf16>
    %52 = vector.shape_cast %49 : vector<8x8xbf16> to vector<1x8x8xbf16>
    tpu.vector_store %arg19[%c3_33, %c0_34, %c0_35], %52 {strides = array<i32>} : memref<4x8x8xbf16, #tpu.memory_space<vmem>>, vector<1x8x8xbf16>,
    %c0_36 = arith.constant 0 : index
    %c0_37 = arith.constant 0 : index
    %c0_38 = arith.constant 0 : index
    %53 = vector.load %arg17[%c0_36, %c0_37, %c0_38] : memref<4x8x8xbf16, #tpu.memory_space<vmem>>, vector<4x8x8xbf16>
    %c0_39 = arith.constant 0 : index
    %c0_40 = arith.constant 0 : index
    %c0_41 = arith.constant 0 : index
    %54 = vector.load %arg18[%c0_39, %c0_40, %c0_41] : memref<4x8x8xbf16, #tpu.memory_space<vmem>>, vector<4x8x8xbf16>
    "tpu.trace_start"() <{level = 10 : i32, message = "hqd,hkd->hqk"}> : () -> ()
    %cst_42 = arith.constant dense<0.000000e+00> : vector<4x8x8xf32>
    %55 = tpu.matmul %53, %54, %cst_42 {dimension_numbers = #tpu.dot_dimension_numbers<[2], [2], [1], [1], [0, 0, 0, 1, 1, 1], [0], [0]>} : vector<4x8x8xbf16>, vector<4x8x8xbf16>, vector<4x8x8xf32> -> vector<4x8x8xf32>
    "tpu.trace_stop"() : () -> ()
    %c0_43 = arith.constant 0 : index
    %c0_44 = arith.constant 0 : index
    %c0_45 = arith.constant 0 : index
    %56 = vector.load %arg20[%c0_43, %c0_44, %c0_45] : memref<4x8x1xf32, #tpu.memory_space<vmem>>, vector<4x8x1xf32>
    %cst_46 = arith.constant dense<0xFF800000> : vector<4x8xf32>
    %57 = vector.multi_reduction <maximumf>, %55, %cst_46 [2] : vector<4x8x8xf32> to vector<4x8xf32>
    %58 = vector.shape_cast %57 : vector<4x8xf32> to vector<4x8x1xf32>
    %59 = arith.maximumf %56, %58 : vector<4x8x1xf32>
    %60 = arith.subf %56, %59 : vector<4x8x1xf32>
    %61 = math.exp %60 : vector<4x8x1xf32>
    %62 = vector.broadcast %59 : vector<4x8x1xf32> to vector<4x8x8xf32>
    %63 = arith.subf %55, %62 : vector<4x8x8xf32>
    %64 = math.exp %63 : vector<4x8x8xf32>
    %c0_47 = arith.constant 0 : index
    %c0_48 = arith.constant 0 : index
    %c0_49 = arith.constant 0 : index
    %65 = vector.load %arg21[%c0_47, %c0_48, %c0_49] : memref<4x8x1xf32, #tpu.memory_space<vmem>>, vector<4x8x1xf32>
    %66 = arith.mulf %61, %65 : vector<4x8x1xf32>
    %cst_50 = arith.constant dense<0.000000e+00> : vector<4x8xf32>
    %67 = vector.multi_reduction <add>, %64, %cst_50 [2] : vector<4x8x8xf32> to vector<4x8xf32>
    %68 = vector.shape_cast %67 : vector<4x8xf32> to vector<4x8x1xf32>
    %69 = arith.addf %66, %68 : vector<4x8x1xf32>
    %c0_51 = arith.constant 0 : index
    %c0_52 = arith.constant 0 : index
    %c0_53 = arith.constant 0 : index
    %70 = vector.load %arg21[%c0_51, %c0_52, %c0_53] : memref<4x8x1xf32, #tpu.memory_space<vmem>>, vector<4x8x1xf32>
    tpu.vector_store %arg21[%c0_51, %c0_52, %c0_53], %69 {strides = array<i32>} : memref<4x8x1xf32, #tpu.memory_space<vmem>>, vector<4x8x1xf32>,
    %c0_54 = arith.constant 0 : index
    %c0_55 = arith.constant 0 : index
    %c0_56 = arith.constant 0 : index
    %71 = vector.load %arg22[%c0_54, %c0_55, %c0_56] : memref<4x8x8xf32, #tpu.memory_space<vmem>>, vector<4x8x8xf32>
    %72 = vector.broadcast %61 : vector<4x8x1xf32> to vector<4x8x8xf32>
    %73 = arith.mulf %72, %71 : vector<4x8x8xf32>
    %74 = arith.truncf %64 : vector<4x8x8xf32> to vector<4x8x8xbf16>
    %c0_57 = arith.constant 0 : index
    %c0_58 = arith.constant 0 : index
    %c0_59 = arith.constant 0 : index
    %75 = vector.load %arg19[%c0_57, %c0_58, %c0_59] : memref<4x8x8xbf16, #tpu.memory_space<vmem>>, vector<4x8x8xbf16>
    "tpu.trace_start"() <{level = 10 : i32, message = "hqk,hkd->hqd"}> : () -> ()
    %cst_60 = arith.constant dense<0.000000e+00> : vector<4x8x8xf32>
    %76 = tpu.matmul %74, %75, %cst_60 {dimension_numbers = #tpu.dot_dimension_numbers<[2], [1], [1], [2], [0, 0, 0, 1, 1, 2], [0], [0]>} : vector<4x8x8xbf16>, vector<4x8x8xbf16>, vector<4x8x8xf32> -> vector<4x8x8xf32>
    "tpu.trace_stop"() : () -> ()
    %77 = arith.addf %73, %76 : vector<4x8x8xf32>
    %c0_61 = arith.constant 0 : index
    %c0_62 = arith.constant 0 : index
    %c0_63 = arith.constant 0 : index
    %78 = vector.load %arg22[%c0_61, %c0_62, %c0_63] : memref<4x8x8xf32, #tpu.memory_space<vmem>>, vector<4x8x8xf32>
    tpu.vector_store %arg22[%c0_61, %c0_62, %c0_63], %77 {strides = array<i32>} : memref<4x8x8xf32, #tpu.memory_space<vmem>>, vector<4x8x8xf32>,
    %c0_64 = arith.constant 0 : index
    %c0_65 = arith.constant 0 : index
    %c0_66 = arith.constant 0 : index
    %79 = vector.load %arg20[%c0_64, %c0_65, %c0_66] : memref<4x8x1xf32, #tpu.memory_space<vmem>>, vector<4x8x1xf32>
    tpu.vector_store %arg20[%c0_64, %c0_65, %c0_66], %59 {strides = array<i32>} : memref<4x8x1xf32, #tpu.memory_space<vmem>>, vector<4x8x1xf32>,
    %c0_i32_67 = arith.constant 0 : i32
    %80 = arith.cmpi eq, %arg2, %c0_i32_67 : i32
    %81 = arith.extui %80 : i1 to i32
    %c0_i32_68 = arith.constant 0 : i32
    %82 = arith.cmpi ne, %81, %c0_i32_68 : i32
    scf.if %82 {
      %c0_69 = arith.constant 0 : index
      %c0_70 = arith.constant 0 : index
      %c0_71 = arith.constant 0 : index
      %83 = vector.load %arg21[%c0_69, %c0_70, %c0_71] : memref<4x8x1xf32, #tpu.memory_space<vmem>>, vector<4x8x1xf32>
      %84 = tpu.reciprocal %83 {approx = true} : vector<4x8x1xf32> -> vector<4x8x1xf32>
      %c0_72 = arith.constant 0 : index
      %c0_73 = arith.constant 0 : index
      %c0_74 = arith.constant 0 : index
      %85 = vector.load %arg22[%c0_72, %c0_73, %c0_74] : memref<4x8x8xf32, #tpu.memory_space<vmem>>, vector<4x8x8xf32>
      %86 = vector.broadcast %84 : vector<4x8x1xf32> to vector<4x8x8xf32>
      %87 = arith.mulf %85, %86 : vector<4x8x8xf32>
      %88 = arith.truncf %87 : vector<4x8x8xf32> to vector<4x8x8xbf16>
      %c0_75 = arith.constant 0 : index
      %c0_76 = arith.constant 0 : index
      %89 = vector.load %arg13[%c0_75, %c0_76] : memref<1x32xf32, #tpu.memory_space<vmem>>, vector<1x32xf32>
      %90 = vector.extract_strided_slice %88 {offsets = [0, 0, 0], sizes = [1, 8, 8], strides = [1, 1, 1]} : vector<4x8x8xbf16> to vector<1x8x8xbf16>
      %91 = vector.shape_cast %90 : vector<1x8x8xbf16> to vector<8x8xbf16>
      %c0_77 = arith.constant 0 : index
      %c0_78 = arith.constant 0 : index
      %c0_79 = arith.constant 0 : index
      %92 = vector.load %arg9[%c0_77, %c0_78, %c0_79] : memref<4x8x32xbf16, #tpu.memory_space<vmem>>, vector<1x8x32xbf16>
      %93 = vector.shape_cast %92 : vector<1x8x32xbf16> to vector<8x32xbf16>
      %cst_80 = arith.constant dense<0.000000e+00> : vector<8x32xf32>
      %94 = tpu.matmul %91, %93, %cst_80 {dimension_numbers = #tpu.dot_dimension_numbers<[1], [0], [0], [1], [0, 0, 1, 1], [], []>} : vector<8x8xbf16>, vector<8x32xbf16>, vector<8x32xf32> -> vector<8x32xf32>
      %95 = vector.broadcast %89 : vector<1x32xf32> to vector<8x32xf32>
      %96 = arith.addf %95, %94 : vector<8x32xf32>
      %97 = vector.extract_strided_slice %88 {offsets = [1, 0, 0], sizes = [1, 8, 8], strides = [1, 1, 1]} : vector<4x8x8xbf16> to vector<1x8x8xbf16>
      %98 = vector.shape_cast %97 : vector<1x8x8xbf16> to vector<8x8xbf16>
      %c1_81 = arith.constant 1 : index
      %c0_82 = arith.constant 0 : index
      %c0_83 = arith.constant 0 : index
      %99 = vector.load %arg9[%c1_81, %c0_82, %c0_83] : memref<4x8x32xbf16, #tpu.memory_space<vmem>>, vector<1x8x32xbf16>
      %100 = vector.shape_cast %99 : vector<1x8x32xbf16> to vector<8x32xbf16>
      %cst_84 = arith.constant dense<0.000000e+00> : vector<8x32xf32>
      %101 = tpu.matmul %98, %100, %cst_84 {dimension_numbers = #tpu.dot_dimension_numbers<[1], [0], [0], [1], [0, 0, 1, 1], [], []>} : vector<8x8xbf16>, vector<8x32xbf16>, vector<8x32xf32> -> vector<8x32xf32>
      %102 = arith.addf %96, %101 : vector<8x32xf32>
      %103 = vector.extract_strided_slice %88 {offsets = [2, 0, 0], sizes = [1, 8, 8], strides = [1, 1, 1]} : vector<4x8x8xbf16> to vector<1x8x8xbf16>
      %104 = vector.shape_cast %103 : vector<1x8x8xbf16> to vector<8x8xbf16>
      %c2_85 = arith.constant 2 : index
      %c0_86 = arith.constant 0 : index
      %c0_87 = arith.constant 0 : index
      %105 = vector.load %arg9[%c2_85, %c0_86, %c0_87] : memref<4x8x32xbf16, #tpu.memory_space<vmem>>, vector<1x8x32xbf16>
      %106 = vector.shape_cast %105 : vector<1x8x32xbf16> to vector<8x32xbf16>
      %cst_88 = arith.constant dense<0.000000e+00> : vector<8x32xf32>
      %107 = tpu.matmul %104, %106, %cst_88 {dimension_numbers = #tpu.dot_dimension_numbers<[1], [0], [0], [1], [0, 0, 1, 1], [], []>} : vector<8x8xbf16>, vector<8x32xbf16>, vector<8x32xf32> -> vector<8x32xf32>
      %108 = arith.addf %102, %107 : vector<8x32xf32>
      %109 = vector.extract_strided_slice %88 {offsets = [3, 0, 0], sizes = [1, 8, 8], strides = [1, 1, 1]} : vector<4x8x8xbf16> to vector<1x8x8xbf16>
      %110 = vector.shape_cast %109 : vector<1x8x8xbf16> to vector<8x8xbf16>
      %c3_89 = arith.constant 3 : index
      %c0_90 = arith.constant 0 : index
      %c0_91 = arith.constant 0 : index
      %111 = vector.load %arg9[%c3_89, %c0_90, %c0_91] : memref<4x8x32xbf16, #tpu.memory_space<vmem>>, vector<1x8x32xbf16>
      %112 = vector.shape_cast %111 : vector<1x8x32xbf16> to vector<8x32xbf16>
      %cst_92 = arith.constant dense<0.000000e+00> : vector<8x32xf32>
      %113 = tpu.matmul %110, %112, %cst_92 {dimension_numbers = #tpu.dot_dimension_numbers<[1], [0], [0], [1], [0, 0, 1, 1], [], []>} : vector<8x8xbf16>, vector<8x32xbf16>, vector<8x32xf32> -> vector<8x32xf32>
      %114 = arith.addf %108, %113 : vector<8x32xf32>
      %c0_93 = arith.constant 0 : index
      %c0_94 = arith.constant 0 : index
      %c0_95 = arith.constant 0 : index
      %115 = vector.load %arg3[%c0_93, %c0_94, %c0_95] : memref<1x8x32xf32, #tpu.memory_space<vmem>>, vector<1x8x32xf32>
      %116 = vector.shape_cast %115 : vector<1x8x32xf32> to vector<8x32xf32>
      %117 = arith.addf %116, %114 : vector<8x32xf32>
      %cst_96 = arith.constant dense<0.000000e+00> : vector<8xf32>
      %118 = vector.multi_reduction <add>, %117, %cst_96 [1] : vector<8x32xf32> to vector<8xf32>
      %119 = vector.shape_cast %118 : vector<8xf32> to vector<8x1xf32>
      %cst_97 = arith.constant 3.200000e+01 : f32
      %120 = vector.broadcast %cst_97 : f32 to vector<8x1xf32>
      %121 = arith.divf %119, %120 : vector<8x1xf32>
      %122 = vector.broadcast %121 : vector<8x1xf32> to vector<8x32xf32>
      %123 = arith.subf %117, %122 : vector<8x32xf32>
      %124 = arith.mulf %123, %123 : vector<8x32xf32>
      %cst_98 = arith.constant dense<0.000000e+00> : vector<8xf32>
      %125 = vector.multi_reduction <add>, %124, %cst_98 [1] : vector<8x32xf32> to vector<8xf32>
      %126 = vector.shape_cast %125 : vector<8xf32> to vector<8x1xf32>
      %cst_99 = arith.constant 3.200000e+01 : f32
      %127 = vector.broadcast %cst_99 : f32 to vector<8x1xf32>
      %128 = arith.divf %126, %127 : vector<8x1xf32>
      %129 = vector.broadcast %121 : vector<8x1xf32> to vector<8x32xf32>
      %130 = arith.subf %117, %129 : vector<8x32xf32>
      %cst_100 = arith.constant 9.99999974E-6 : f32
      %131 = vector.broadcast %cst_100 : f32 to vector<8x1xf32>
      %132 = arith.addf %128, %131 : vector<8x1xf32>
      %133 = math.rsqrt %132 : vector<8x1xf32>
      %134 = vector.broadcast %133 : vector<8x1xf32> to vector<8x32xf32>
      %135 = arith.mulf %130, %134 : vector<8x32xf32>
      %c0_101 = arith.constant 0 : index
      %c0_102 = arith.constant 0 : index
      %136 = vector.load %arg14[%c0_101, %c0_102] : memref<1x32xf32, #tpu.memory_space<vmem>>, vector<1x32xf32>
      %137 = vector.broadcast %136 : vector<1x32xf32> to vector<8x32xf32>
      %138 = arith.mulf %135, %137 : vector<8x32xf32>
      %c0_103 = arith.constant 0 : index
      %c0_104 = arith.constant 0 : index
      %139 = vector.load %arg15[%c0_103, %c0_104] : memref<1x32xf32, #tpu.memory_space<vmem>>, vector<1x32xf32>
      %140 = vector.broadcast %139 : vector<1x32xf32> to vector<8x32xf32>
      %141 = arith.addf %138, %140 : vector<8x32xf32>
      %c0_105 = arith.constant 0 : index
      %c0_106 = arith.constant 0 : index
      %c0_107 = arith.constant 0 : index
      %142 = vector.load %arg16[%c0_105, %c0_106, %c0_107] : memref<1x8x32xf32, #tpu.memory_space<vmem>>, vector<1x8x32xf32>
      %143 = vector.shape_cast %142 : vector<1x8x32xf32> to vector<8x32xf32>
      %144 = vector.shape_cast %141 : vector<8x32xf32> to vector<1x8x32xf32>
      tpu.vector_store %arg16[%c0_105, %c0_106, %c0_107], %144 {strides = array<i32>} : memref<1x8x32xf32, #tpu.memory_space<vmem>>, vector<1x8x32xf32>,
    } else {
    }
    return
  }
  func.func @transform_0(%arg0: i32, %arg1: i32, %arg2: i32) -> (i32, i32, i32) {
    %c0_i32 = arith.constant 0 : i32
    %c0_i32_0 = arith.constant 0 : i32
    return %arg0, %arg1, %c0_i32 : i32, i32, i32
  }
  func.func @transform_1(%arg0: i32, %arg1: i32, %arg2: i32) -> (i32, i32, i32) {
    %c0_i32 = arith.constant 0 : i32
    %c0_i32_0 = arith.constant 0 : i32
    return %arg0, %arg2, %c0_i32 : i32, i32, i32
  }
  func.func @transform_2(%arg0: i32, %arg1: i32, %arg2: i32) -> (i32, i32, i32) {
    %c0_i32 = arith.constant 0 : i32
    %c0_i32_0 = arith.constant 0 : i32
    return %arg0, %arg2, %c0_i32 : i32, i32, i32
  }
  func.func @transform_3(%arg0: i32, %arg1: i32, %arg2: i32) -> (i32, i32) {
    %c0_i32 = arith.constant 0 : i32
    %c0_i32_0 = arith.constant 0 : i32
    %c0_i32_1 = arith.constant 0 : i32
    return %c0_i32, %c0_i32_0 : i32, i32
  }
  func.func @transform_4(%arg0: i32, %arg1: i32, %arg2: i32) -> (i32, i32) {
    %c0_i32 = arith.constant 0 : i32
    %c0_i32_0 = arith.constant 0 : i32
    %c0_i32_1 = arith.constant 0 : i32
    return %c0_i32, %c0_i32_0 : i32, i32
  }
  func.func @transform_5(%arg0: i32, %arg1: i32, %arg2: i32) -> (i32, i32) {
    %c0_i32 = arith.constant 0 : i32
    %c0_i32_0 = arith.constant 0 : i32
    %c0_i32_1 = arith.constant 0 : i32
    return %c0_i32, %c0_i32_0 : i32, i32
  }
  func.func @transform_6(%arg0: i32, %arg1: i32, %arg2: i32) -> (i32, i32, i32) {
    %c0_i32 = arith.constant 0 : i32
    %c0_i32_0 = arith.constant 0 : i32
    %c0_i32_1 = arith.constant 0 : i32
    %c0_i32_2 = arith.constant 0 : i32
    return %c0_i32, %c0_i32_0, %c0_i32_1 : i32, i32, i32
  }
  func.func @transform_7(%arg0: i32, %arg1: i32, %arg2: i32) -> (i32, i32) {
    %c0_i32 = arith.constant 0 : i32
    %c0_i32_0 = arith.constant 0 : i32
    %c0_i32_1 = arith.constant 0 : i32
    return %c0_i32, %c0_i32_0 : i32, i32
  }
  func.func @transform_8(%arg0: i32, %arg1: i32, %arg2: i32) -> (i32, i32) {
    %c0_i32 = arith.constant 0 : i32
    %c0_i32_0 = arith.constant 0 : i32
    %c0_i32_1 = arith.constant 0 : i32
    return %c0_i32, %c0_i32_0 : i32, i32
  }
  func.func @transform_9(%arg0: i32, %arg1: i32, %arg2: i32) -> (i32, i32) {
    %c0_i32 = arith.constant 0 : i32
    %c0_i32_0 = arith.constant 0 : i32
    %c0_i32_1 = arith.constant 0 : i32
    return %c0_i32, %c0_i32_0 : i32, i32
  }
  func.func @transform_10(%arg0: i32, %arg1: i32, %arg2: i32) -> (i32, i32) {
    %c0_i32 = arith.constant 0 : i32
    %c0_i32_0 = arith.constant 0 : i32
    %c0_i32_1 = arith.constant 0 : i32
    return %c0_i32, %c0_i32_0 : i32, i32
  }
  func.func @transform_11(%arg0: i32, %arg1: i32, %arg2: i32) -> (i32, i32) {
    %c0_i32 = arith.constant 0 : i32
    %c0_i32_0 = arith.constant 0 : i32
    %c0_i32_1 = arith.constant 0 : i32
    return %c0_i32, %c0_i32_0 : i32, i32
  }
  func.func @transform_12(%arg0: i32, %arg1: i32, %arg2: i32) -> (i32, i32) {
    %c0_i32 = arith.constant 0 : i32
    %c0_i32_0 = arith.constant 0 : i32
    %c0_i32_1 = arith.constant 0 : i32
    return %c0_i32, %c0_i32_0 : i32, i32
  }
  func.func @transform_13(%arg0: i32, %arg1: i32, %arg2: i32) -> (i32, i32, i32) {
    %c0_i32 = arith.constant 0 : i32
    %c0_i32_0 = arith.constant 0 : i32
    return %arg0, %arg1, %c0_i32 : i32, i32, i32
  }
}

</mosaic_0001>

<llo_original>
// kernel: tpu_custom_call.1
$region0: #{tpu_custom_call.1}
  #allocation0 [shape = 'u32[]', space=smem, size = 0x4, offset = 0x4, fixed_abs, tag = 'smem constant byte address 0x4 - core index']
  #allocation1 [shape = 'u32[72,128]{1,0:T(1,128)}', space=vmem, size = 0x9000, scoped, tag = 'internal scratch']
  #allocation2 [shape = 'bf16[4,8,8]{2,1,0:T(8,128)(2,1)}', space=vmem, size = 0x2000, scoped, tag = 'scratch operand']
  #allocation3 [shape = 'bf16[4,8,8]{2,1,0:T(8,128)(2,1)}', space=vmem, size = 0x2000, scoped, tag = 'scratch operand']
  #allocation4 [shape = 'bf16[4,8,8]{2,1,0:T(8,128)(2,1)}', space=vmem, size = 0x2000, scoped, tag = 'scratch operand']
  #allocation5 [shape = 'f32[4,8,1]{2,1,0:T(8,128)}', space=vmem, size = 0x4000, scoped, tag = 'scratch operand']
  #allocation6 [shape = 'f32[4,8,1]{2,1,0:T(8,128)}', space=vmem, size = 0x4000, scoped, tag = 'scratch operand']
  #allocation7 [shape = 'f32[4,8,8]{2,1,0:T(8,128)}', space=vmem, size = 0x4000, scoped, tag = 'scratch operand']
  %s0 = inlined_call_operand.hbm [shape: f32[2,8,32], index: 0, kind: input, shape index: {}]
  %s1 = inlined_call_operand.hbm [shape: f32[2,8,32], index: 1, kind: input, shape index: {}]
  %s2 = inlined_call_operand.hbm [shape: f32[2,8,32], index: 2, kind: input, shape index: {}]
  %s3 = inlined_call_operand.hbm [shape: bf16[32,32], index: 3, kind: input, shape index: {}]
  %s4 = inlined_call_operand.hbm [shape: bf16[32,32], index: 4, kind: input, shape index: {}]
  %s5 = inlined_call_operand.hbm [shape: bf16[32,32], index: 5, kind: input, shape index: {}]
  %s6 = inlined_call_operand.hbm [shape: bf16[4,8,32], index: 6, kind: input, shape index: {}]
  %s7 = inlined_call_operand.vmem [shape: f32[1,32], index: 7, kind: input, shape index: {}]
  %s8 = inlined_call_operand.vmem [shape: f32[1,32], index: 8, kind: input, shape index: {}]
  %s9 = inlined_call_operand.vmem [shape: f32[1,32], index: 9, kind: input, shape index: {}]
  %s10 = inlined_call_operand.vmem [shape: f32[1,32], index: 10, kind: input, shape index: {}]
  %s11 = inlined_call_operand.vmem [shape: f32[1,32], index: 11, kind: input, shape index: {}]
  %s12 = inlined_call_operand.vmem [shape: f32[1,32], index: 12, kind: input, shape index: {}]
  %s13 = inlined_call_operand.hbm [shape: f32[2,8,32], index: 13, kind: output, shape index: {}]
  %s14 = sld [smem:[#allocation0]]
  $region121: #{tpu_custom_call.1} parent=0
    _
  %s16 = ssub.s32 1, %s14
  %s17 = scalar_select 0, %s16, %s14
  $region1: #{tpu_custom_call.1} parent=0
    #allocation8 [shape = 'u8[8192]{0}', space=vmem, size = 0x2000, scoped, tag = 'input window, operand 0']
    #allocation9 [shape = 's32[2]{0}', space=sflag, size = 0x8, scoped, tag = 'scoped memory for tpu_custom_call.1']
    #allocation10 [shape = 's32[2]{0}', space=sflag, size = 0x8, scoped, tag = 'scoped memory for tpu_custom_call.1']
    #allocation11 [shape = 'u8[8192]{0}', space=vmem, size = 0x2000, scoped, tag = 'input window, operand 1']
    #allocation12 [shape = 's32[2]{0}', space=sflag, size = 0x8, scoped, tag = 'scoped memory for tpu_custom_call.1']
    #allocation13 [shape = 'u8[8192]{0}', space=vmem, size = 0x2000, scoped, tag = 'input window, operand 2']
    #allocation14 [shape = 'u8[8192]{0}', space=vmem, size = 0x2000, scoped, tag = 'input window, operand 3, single buffered']
    #allocation15 [shape = 's32[1]{0}', space=sflag, size = 0x4, scoped, tag = 'scoped memory for tpu_custom_call.1']
    #allocation16 [shape = 'u8[8192]{0}', space=vmem, size = 0x2000, scoped, tag = 'input window, operand 4, single buffered']
    #allocation17 [shape = 'u8[8192]{0}', space=vmem, size = 0x2000, scoped, tag = 'input window, operand 5, single buffered']
    #allocation18 [shape = 's32[1]{0}', space=sflag, size = 0x4, scoped, tag = 'scoped memory for tpu_custom_call.1']
    #allocation19 [shape = 'u8[8192]{0}', space=vmem, size = 0x2000, scoped, tag = 'input window, operand 6, single buffered']
    #allocation20 [shape = 'u8[8192]{0}', space=vmem, size = 0x2000, scoped, tag = 'output window, operand 0']
    %18 = vsyncpa [#allocation9], 0
    %s19 = scalar_lea.sflag [#allocation9], 1
    %20 = vsyncpa %s19, 0
    %21 = vsyncpa [#allocation12], 0
    %s22 = scalar_lea.sflag [#allocation12], 1
    %23 = vsyncpa %s22, 0
    %24 = vsyncpa [#allocation15], 0
    %25 = vsyncpa [#allocation18], 0
    %26 = vsyncpa [#allocation10], 0
    %s27 = scalar_lea.sflag [#allocation10], 1
    %28 = vsyncpa %s27, 0
    loop: start=0, step=1, limit=4
    $region2: #{tpu_custom_call.1} parent=1 // loop_pre_header
      _
    $region3: #{tpu_custom_call.1} parent=1 // loop_header
      %s30 = sphi 0, %s34
      %p31 = scmp.ge.s32.totalorder %s30, 4
      %s37 = sphi 0, %s56
      %s38 = sphi 0, %s52
      %s39 = sphi 0, %s48
      %s40 = sphi 0, %s37
      %s41 = sphi 0, %s38
      %s42 = sphi 0, %s39
      %s43 = sphi 0, %s40
      %s44 = sphi 0, %s41
      %s45 = sphi 0, %s42
      %s61 = sphi 0, %s63
      %s64 = sphi 0, %s61
      %s65 = sphi 0, %s64
      %s81 = sphi 0, %s65
      %s89 = sphi 0, %s91
      %s92 = sphi 0, %s89
      %s93 = sphi 0, %s92
      %s109 = sphi 0, %s93
      %s117 = sphi 0, %s119
      %s120 = sphi 0, %s117
      %s121 = sphi 0, %s120
      %s137 = sphi 0, %s121
      %s141 = sphi 0, %s141
      %s143 = sphi 0, %s141
      %s144 = sphi 0, %s143
      %s158 = sphi 0, %s144
      %s162 = sphi 0, %s162
      %s164 = sphi 0, %s162
      %s165 = sphi 0, %s164
      %s179 = sphi 0, %s165
      %s183 = sphi 0, %s183
      %s185 = sphi 0, %s183
      %s186 = sphi 0, %s185
      %s200 = sphi 0, %s186
      %s204 = sphi 0, %s204
      %s206 = sphi 0, %s204
      %s207 = sphi 0, %s206
      %s221 = sphi 0, %s207
      %s225 = sphi 0, %s225
      %s227 = sphi 0, %s225
      %s228 = sphi 0, %s227
      %s242 = sphi 0, %s228
      %s246 = sphi 0, %s246
      %s248 = sphi 0, %s246
      %s249 = sphi 0, %s248
      %s263 = sphi 0, %s249
      %s267 = sphi 0, %s267
      %s269 = sphi 0, %s267
      %s270 = sphi 0, %s269
      %s284 = sphi 0, %s270
      %s288 = sphi 0, %s288
      %s290 = sphi 0, %s288
      %s291 = sphi 0, %s290
      %s305 = sphi 0, %s291
      %s309 = sphi 0, %s309
      %s311 = sphi 0, %s309
      %s312 = sphi 0, %s311
      %s326 = sphi 0, %s312
      %s330 = sphi 0, %s330
      %s332 = sphi 0, %s330
      %s333 = sphi 0, %s332
      %s347 = sphi 0, %s333
      %s355 = sphi 0, %s357
      %s358 = sphi 0, %s355
      %s359 = sphi 0, %s358
      %s375 = sphi 0, %s359
    $region4: #{tpu_custom_call.1} parent=1 // loop_header_branch
      %33 = sbr.rel (%p31) target = $region8
    $region5: #{tpu_custom_call.1} parent=1 // loop_body
      %s35 = ssub.s32 %s30, 1
      %s36 = ssub.s32 %s30, 2
      %s46 = sadd.s32 1, %s39
      %p47 = scmp.ge.s32.totalorder %s46, 1
      %s48 = scalar_select %p47, 0, %s46
      %s49 = sadd.s32 1, %s38
      %s50 = scalar_select %p47, %s49, %s38
      %p51 = scmp.ge.s32.totalorder %s50, 1
      %s52 = scalar_select %p51, 0, %s50
      %s53 = sadd.s32 1, %s37
      %s54 = scalar_select %p51, %s53, %s37
      %p55 = scmp.ge.s32.totalorder %s54, 2
      %s56 = scalar_select %p55, 0, %s54
      %s57 = ssub.s32 %s37, %s56
      %s58 = ssub.s32 %s38, %s52
      %s59 = sor.u32 %s57, %s58
      %p60 = scmp.eq.s32.totalorder %s59, 0
      %s62 = sadd.s32 %s61, 1
      %s63 = scalar_select %p60, %s61, %s62
      %p66 = pneg %p60
      %p67 = scmp.eq.s32.totalorder %s30, 1
      %p68 = por %p66, %p67
      %p69 = scmp.ne.s32.totalorder %s61, %s64
      %p70 = scmp.eq.s32.totalorder %s30, 0
      %p71 = por %p69, %p70
      %p72 = scmp.ne.s32.totalorder %s61, %s64
      %p73 = scmp.eq.s32.totalorder %s35, 1
      %p74 = por %p72, %p73
      %p75 = scmp.ne.s32.totalorder %s64, %s65
      %p76 = scmp.eq.s32.totalorder %s35, 0
      %p77 = por %p75, %p76
      %p78 = scmp.ne.s32.totalorder %s64, %s65
      %p79 = scmp.eq.s32.totalorder %s36, 1
      %p80 = por %p78, %p79
      %p82 = scmp.ne.s32.totalorder %s65, %s81
      %p83 = scmp.eq.s32.totalorder %s36, 0
      %p84 = por %p82, %p83
      %s85 = ssub.s32 %s37, %s56
      %s86 = ssub.s32 %s39, %s48
      %s87 = sor.u32 %s85, %s86
      %p88 = scmp.eq.s32.totalorder %s87, 0
      %s90 = sadd.s32 %s89, 1
      %s91 = scalar_select %p88, %s89, %s90
      %p94 = pneg %p88
      %p95 = scmp.eq.s32.totalorder %s30, 1
      %p96 = por %p94, %p95
      %p97 = scmp.ne.s32.totalorder %s89, %s92
      %p98 = scmp.eq.s32.totalorder %s30, 0
      %p99 = por %p97, %p98
      %p100 = scmp.ne.s32.totalorder %s89, %s92
      %p101 = scmp.eq.s32.totalorder %s35, 1
      %p102 = por %p100, %p101
      %p103 = scmp.ne.s32.totalorder %s92, %s93
      %p104 = scmp.eq.s32.totalorder %s35, 0
      %p105 = por %p103, %p104
      %p106 = scmp.ne.s32.totalorder %s92, %s93
      %p107 = scmp.eq.s32.totalorder %s36, 1
      %p108 = por %p106, %p107
      %p110 = scmp.ne.s32.totalorder %s93, %s109
      %p111 = scmp.eq.s32.totalorder %s36, 0
      %p112 = por %p110, %p111
      %s113 = ssub.s32 %s37, %s56
      %s114 = ssub.s32 %s39, %s48
      %s115 = sor.u32 %s113, %s114
      %p116 = scmp.eq.s32.totalorder %s115, 0
      %s118 = sadd.s32 %s117, 1
      %s119 = scalar_select %p116, %s117, %s118
      %p122 = pneg %p116
      %p123 = scmp.eq.s32.totalorder %s30, 1
      %p124 = por %p122, %p123
      %p125 = scmp.ne.s32.totalorder %s117, %s120
      %p126 = scmp.eq.s32.totalorder %s30, 0
      %p127 = por %p125, %p126
      %p128 = scmp.ne.s32.totalorder %s117, %s120
      %p129 = scmp.eq.s32.totalorder %s35, 1
      %p130 = por %p128, %p129
      %p131 = scmp.ne.s32.totalorder %s120, %s121
      %p132 = scmp.eq.s32.totalorder %s35, 0
      %p133 = por %p131, %p132
      %p134 = scmp.ne.s32.totalorder %s120, %s121
      %p135 = scmp.eq.s32.totalorder %s36, 1
      %p136 = por %p134, %p135
      %p138 = scmp.ne.s32.totalorder %s121, %s137
      %p139 = scmp.eq.s32.totalorder %s36, 0
      %p140 = por %p138, %p139
      %s142 = sadd.s32 %s141, 1
      %p145 = scmp.eq.s32.totalorder %s30, 1
      %p146 = scmp.ne.s32.totalorder %s141, %s143
      %p147 = scmp.eq.s32.totalorder %s30, 0
      %p148 = por %p146, %p147
      %p149 = scmp.ne.s32.totalorder %s141, %s143
      %p150 = scmp.eq.s32.totalorder %s35, 1
      %p151 = por %p149, %p150
      %p152 = scmp.ne.s32.totalorder %s143, %s144
      %p153 = scmp.eq.s32.totalorder %s35, 0
      %p154 = por %p152, %p153
      %p155 = scmp.ne.s32.totalorder %s143, %s144
      %p156 = scmp.eq.s32.totalorder %s36, 1
      %p157 = por %p155, %p156
      %p159 = scmp.ne.s32.totalorder %s144, %s158
      %p160 = scmp.eq.s32.totalorder %s36, 0
      %p161 = por %p159, %p160
      %s163 = sadd.s32 %s162, 1
      %p166 = scmp.eq.s32.totalorder %s30, 1
      %p167 = scmp.ne.s32.totalorder %s162, %s164
      %p168 = scmp.eq.s32.totalorder %s30, 0
      %p169 = por %p167, %p168
      %p170 = scmp.ne.s32.totalorder %s162, %s164
      %p171 = scmp.eq.s32.totalorder %s35, 1
      %p172 = por %p170, %p171
      %p173 = scmp.ne.s32.totalorder %s164, %s165
      %p174 = scmp.eq.s32.totalorder %s35, 0
      %p175 = por %p173, %p174
      %p176 = scmp.ne.s32.totalorder %s164, %s165
      %p177 = scmp.eq.s32.totalorder %s36, 1
      %p178 = por %p176, %p177
      %p180 = scmp.ne.s32.totalorder %s165, %s179
      %p181 = scmp.eq.s32.totalorder %s36, 0
      %p182 = por %p180, %p181
      %s184 = sadd.s32 %s183, 1
      %p187 = scmp.eq.s32.totalorder %s30, 1
      %p188 = scmp.ne.s32.totalorder %s183, %s185
      %p189 = scmp.eq.s32.totalorder %s30, 0
      %p190 = por %p188, %p189
      %p191 = scmp.ne.s32.totalorder %s183, %s185
      %p192 = scmp.eq.s32.totalorder %s35, 1
      %p193 = por %p191, %p192
      %p194 = scmp.ne.s32.totalorder %s185, %s186
      %p195 = scmp.eq.s32.totalorder %s35, 0
      %p196 = por %p194, %p195
      %p197 = scmp.ne.s32.totalorder %s185, %s186
      %p198 = scmp.eq.s32.totalorder %s36, 1
      %p199 = por %p197, %p198
      %p201 = scmp.ne.s32.totalorder %s186, %s200
      %p202 = scmp.eq.s32.totalorder %s36, 0
      %p203 = por %p201, %p202
      %s205 = sadd.s32 %s204, 1
      %p208 = scmp.eq.s32.totalorder %s30, 1
      %p209 = scmp.ne.s32.totalorder %s204, %s206
      %p210 = scmp.eq.s32.totalorder %s30, 0
      %p211 = por %p209, %p210
      %p212 = scmp.ne.s32.totalorder %s204, %s206
      %p213 = scmp.eq.s32.totalorder %s35, 1
      %p214 = por %p212, %p213
      %p215 = scmp.ne.s32.totalorder %s206, %s207
      %p216 = scmp.eq.s32.totalorder %s35, 0
      %p217 = por %p215, %p216
      %p218 = scmp.ne.s32.totalorder %s206, %s207
      %p219 = scmp.eq.s32.totalorder %s36, 1
      %p220 = por %p218, %p219
      %p222 = scmp.ne.s32.totalorder %s207, %s221
      %p223 = scmp.eq.s32.totalorder %s36, 0
      %p224 = por %p222, %p223
      %s226 = sadd.s32 %s225, 1
      %p229 = scmp.eq.s32.totalorder %s30, 1
      %p230 = scmp.ne.s32.totalorder %s225, %s227
      %p231 = scmp.eq.s32.totalorder %s30, 0
      %p232 = por %p230, %p231
      %p233 = scmp.ne.s32.totalorder %s225, %s227
      %p234 = scmp.eq.s32.totalorder %s35, 1
      %p235 = por %p233, %p234
      %p236 = scmp.ne.s32.totalorder %s227, %s228
      %p237 = scmp.eq.s32.totalorder %s35, 0
      %p238 = por %p236, %p237
      %p239 = scmp.ne.s32.totalorder %s227, %s228
      %p240 = scmp.eq.s32.totalorder %s36, 1
      %p241 = por %p239, %p240
      %p243 = scmp.ne.s32.totalorder %s228, %s242
      %p244 = scmp.eq.s32.totalorder %s36, 0
      %p245 = por %p243, %p244
      %s247 = sadd.s32 %s246, 1
      %p250 = scmp.eq.s32.totalorder %s30, 1
      %p251 = scmp.ne.s32.totalorder %s246, %s248
      %p252 = scmp.eq.s32.totalorder %s30, 0
      %p253 = por %p251, %p252
      %p254 = scmp.ne.s32.totalorder %s246, %s248
      %p255 = scmp.eq.s32.totalorder %s35, 1
      %p256 = por %p254, %p255
      %p257 = scmp.ne.s32.totalorder %s248, %s249
      %p258 = scmp.eq.s32.totalorder %s35, 0
      %p259 = por %p257, %p258
      %p260 = scmp.ne.s32.totalorder %s248, %s249
      %p261 = scmp.eq.s32.totalorder %s36, 1
      %p262 = por %p260, %p261
      %p264 = scmp.ne.s32.totalorder %s249, %s263
      %p265 = scmp.eq.s32.totalorder %s36, 0
      %p266 = por %p264, %p265
      %s268 = sadd.s32 %s267, 1
      %p271 = scmp.eq.s32.totalorder %s30, 1
      %p272 = scmp.ne.s32.totalorder %s267, %s269
      %p273 = scmp.eq.s32.totalorder %s30, 0
      %p274 = por %p272, %p273
      %p275 = scmp.ne.s32.totalorder %s267, %s269
      %p276 = scmp.eq.s32.totalorder %s35, 1
      %p277 = por %p275, %p276
      %p278 = scmp.ne.s32.totalorder %s269, %s270
      %p279 = scmp.eq.s32.totalorder %s35, 0
      %p280 = por %p278, %p279
      %p281 = scmp.ne.s32.totalorder %s269, %s270
      %p282 = scmp.eq.s32.totalorder %s36, 1
      %p283 = por %p281, %p282
      %p285 = scmp.ne.s32.totalorder %s270, %s284
      %p286 = scmp.eq.s32.totalorder %s36, 0
      %p287 = por %p285, %p286
      %s289 = sadd.s32 %s288, 1
      %p292 = scmp.eq.s32.totalorder %s30, 1
      %p293 = scmp.ne.s32.totalorder %s288, %s290
      %p294 = scmp.eq.s32.totalorder %s30, 0
      %p295 = por %p293, %p294
      %p296 = scmp.ne.s32.totalorder %s288, %s290
      %p297 = scmp.eq.s32.totalorder %s35, 1
      %p298 = por %p296, %p297
      %p299 = scmp.ne.s32.totalorder %s290, %s291
      %p300 = scmp.eq.s32.totalorder %s35, 0
      %p301 = por %p299, %p300
      %p302 = scmp.ne.s32.totalorder %s290, %s291
      %p303 = scmp.eq.s32.totalorder %s36, 1
      %p304 = por %p302, %p303
      %p306 = scmp.ne.s32.totalorder %s291, %s305
      %p307 = scmp.eq.s32.totalorder %s36, 0
      %p308 = por %p306, %p307
      %s310 = sadd.s32 %s309, 1
      %p313 = scmp.eq.s32.totalorder %s30, 1
      %p314 = scmp.ne.s32.totalorder %s309, %s311
      %p315 = scmp.eq.s32.totalorder %s30, 0
      %p316 = por %p314, %p315
      %p317 = scmp.ne.s32.totalorder %s309, %s311
      %p318 = scmp.eq.s32.totalorder %s35, 1
      %p319 = por %p317, %p318
      %p320 = scmp.ne.s32.totalorder %s311, %s312
      %p321 = scmp.eq.s32.totalorder %s35, 0
      %p322 = por %p320, %p321
      %p323 = scmp.ne.s32.totalorder %s311, %s312
      %p324 = scmp.eq.s32.totalorder %s36, 1
      %p325 = por %p323, %p324
      %p327 = scmp.ne.s32.totalorder %s312, %s326
      %p328 = scmp.eq.s32.totalorder %s36, 0
      %p329 = por %p327, %p328
      %s331 = sadd.s32 %s330, 1
      %p334 = scmp.eq.s32.totalorder %s30, 1
      %p335 = scmp.ne.s32.totalorder %s330, %s332
      %p336 = scmp.eq.s32.totalorder %s30, 0
      %p337 = por %p335, %p336
      %p338 = scmp.ne.s32.totalorder %s330, %s332
      %p339 = scmp.eq.s32.totalorder %s35, 1
      %p340 = por %p338, %p339
      %p341 = scmp.ne.s32.totalorder %s332, %s333
      %p342 = scmp.eq.s32.totalorder %s35, 0
      %p343 = por %p341, %p342
      %p344 = scmp.ne.s32.totalorder %s332, %s333
      %p345 = scmp.eq.s32.totalorder %s36, 1
      %p346 = por %p344, %p345
      %p348 = scmp.ne.s32.totalorder %s333, %s347
      %p349 = scmp.eq.s32.totalorder %s36, 0
      %p350 = por %p348, %p349
      %s351 = ssub.s32 %s37, %s56
      %s352 = ssub.s32 %s38, %s52
      %s353 = sor.u32 %s351, %s352
      %p354 = scmp.eq.s32.totalorder %s353, 0
      %s356 = sadd.s32 %s355, 1
      %s357 = scalar_select %p354, %s355, %s356
      %p360 = pneg %p354
      %p361 = scmp.eq.s32.totalorder %s30, 1
      %p362 = por %p360, %p361
      %p363 = scmp.ne.s32.totalorder %s355, %s358
      %p364 = scmp.eq.s32.totalorder %s30, 0
      %p365 = por %p363, %p364
      %p366 = scmp.ne.s32.totalorder %s355, %s358
      %p367 = scmp.eq.s32.totalorder %s35, 1
      %p368 = por %p366, %p367
      %p369 = scmp.ne.s32.totalorder %s358, %s359
      %p370 = scmp.eq.s32.totalorder %s35, 0
      %p371 = por %p369, %p370
      %p372 = scmp.ne.s32.totalorder %s358, %s359
      %p373 = scmp.eq.s32.totalorder %s36, 1
      %p374 = por %p372, %p373
      %p376 = scmp.ne.s32.totalorder %s359, %s375
      %p377 = scmp.eq.s32.totalorder %s36, 0
      %p378 = por %p376, %p377
      %p379 = scmp.le.s32.totalorder 1, %s30
      %p380 = scmp.lt.s32.totalorder %s30, 3
      %p381 = pnand %p379, %p380
      %p382 = pneg %p381
      // Predicated region
      $region9: #{tpu_custom_call.1} parent=5 // pred_check
        _
      $region10: #{tpu_custom_call.1} parent=5 // pred_check_branch
        %384 = sbr.rel (%p381) target = $region12
      $region11: #{tpu_custom_call.1} parent=5 // pred_region
        %s385 = ssub.s32 %s30, 1
        // Predicated region
        $region13: #{tpu_custom_call.1} parent=11 // pred_check
          %p386 = pneg %p154
        $region14: #{tpu_custom_call.1} parent=11 // pred_check_branch
          %388 = sbr.rel (%p386) target = $region16
        $region15: #{tpu_custom_call.1} parent=11 // pred_region
          %390 = vsyncadd [#allocation15], 0
          %s391 = sshll.u32 %s3, 4
          %s392 = int_to_ptr.hbm [resolvable:$true] %s391
          %s393 = sshll.u32 [#allocation14], 4
          %s394 = int_to_ptr.vmem [resolvable:$true] %s393
          %399 = dma.hbm_to_vmem [thread:$0]  %s392, 256, %s394, [#allocation15], 64, 64, 4
        $region16: #{tpu_custom_call.1} parent=11 // pred_fallthru
          _
        // Predicated region
        $region17: #{tpu_custom_call.1} parent=11 // pred_check
          %p400 = pneg %p175
        $region18: #{tpu_custom_call.1} parent=11 // pred_check_branch
          %402 = sbr.rel (%p400) target = $region20
        $region19: #{tpu_custom_call.1} parent=11 // pred_region
          %404 = vsyncadd [#allocation15], 0
          %s405 = sshll.u32 %s4, 4
          %s406 = int_to_ptr.hbm [resolvable:$true] %s405
          %s407 = sshll.u32 [#allocation16], 4
          %s408 = int_to_ptr.vmem [resolvable:$true] %s407
          %413 = dma.hbm_to_vmem [thread:$0]  %s406, 256, %s408, [#allocation15], 64, 64, 4
        $region20: #{tpu_custom_call.1} parent=11 // pred_fallthru
          _
        // Predicated region
        $region21: #{tpu_custom_call.1} parent=11 // pred_check
          %p414 = pneg %p196
        $region22: #{tpu_custom_call.1} parent=11 // pred_check_branch
          %416 = sbr.rel (%p414) target = $region24
        $region23: #{tpu_custom_call.1} parent=11 // pred_region
          %418 = vsyncadd [#allocation18], 0
          %s419 = sshll.u32 %s5, 4
          %s420 = int_to_ptr.hbm [resolvable:$true] %s419
          %s421 = sshll.u32 [#allocation17], 4
          %s422 = int_to_ptr.vmem [resolvable:$true] %s421
          %427 = dma.hbm_to_vmem [thread:$0]  %s420, 256, %s422, [#allocation18], 64, 64, 4
        $region24: #{tpu_custom_call.1} parent=11 // pred_fallthru
          _
        // Predicated region
        $region25: #{tpu_custom_call.1} parent=11 // pred_check
          %p428 = pneg %p217
        $region26: #{tpu_custom_call.1} parent=11 // pred_check_branch
          %430 = sbr.rel (%p428) target = $region28
        $region27: #{tpu_custom_call.1} parent=11 // pred_region
          %432 = vsyncadd [#allocation18], 0
          %s433 = sshll.u32 %s6, 4
          %s434 = int_to_ptr.hbm [resolvable:$true] %s433
          %s435 = sshll.u32 [#allocation19], 4
          %s436 = int_to_ptr.vmem [resolvable:$true] %s435
          %441 = dma.hbm_to_vmem [thread:$0]  %s434, 256, %s436, [#allocation18], 64, 64, 4
        $region28: #{tpu_custom_call.1} parent=11 // pred_fallthru
          _
        // Predicated region
        $region29: #{tpu_custom_call.1} parent=11 // pred_check
          %p442 = pneg %p238
        $region30: #{tpu_custom_call.1} parent=11 // pred_check_branch
          %444 = sbr.rel (%p442) target = $region32
        $region31: #{tpu_custom_call.1} parent=11 // pred_region
          _
        $region32: #{tpu_custom_call.1} parent=11 // pred_fallthru
          _
        // Predicated region
        $region33: #{tpu_custom_call.1} parent=11 // pred_check
          %p445 = pneg %p259
        $region34: #{tpu_custom_call.1} parent=11 // pred_check_branch
          %447 = sbr.rel (%p445) target = $region36
        $region35: #{tpu_custom_call.1} parent=11 // pred_region
          _
        $region36: #{tpu_custom_call.1} parent=11 // pred_fallthru
          _
        // Predicated region
        $region37: #{tpu_custom_call.1} parent=11 // pred_check
          %p448 = pneg %p280
        $region38: #{tpu_custom_call.1} parent=11 // pred_check_branch
          %450 = sbr.rel (%p448) target = $region40
        $region39: #{tpu_custom_call.1} parent=11 // pred_region
          _
        $region40: #{tpu_custom_call.1} parent=11 // pred_fallthru
          _
        // Predicated region
        $region41: #{tpu_custom_call.1} parent=11 // pred_check
          %p451 = pneg %p301
        $region42: #{tpu_custom_call.1} parent=11 // pred_check_branch
          %453 = sbr.rel (%p451) target = $region44
        $region43: #{tpu_custom_call.1} parent=11 // pred_region
          _
        $region44: #{tpu_custom_call.1} parent=11 // pred_fallthru
          _
        // Predicated region
        $region45: #{tpu_custom_call.1} parent=11 // pred_check
          %p454 = pneg %p322
        $region46: #{tpu_custom_call.1} parent=11 // pred_check_branch
          %456 = sbr.rel (%p454) target = $region48
        $region47: #{tpu_custom_call.1} parent=11 // pred_region
          _
        $region48: #{tpu_custom_call.1} parent=11 // pred_fallthru
          _
        // Predicated region
        $region49: #{tpu_custom_call.1} parent=11 // pred_check
          %p457 = pneg %p343
        $region50: #{tpu_custom_call.1} parent=11 // pred_check_branch
          %459 = sbr.rel (%p457) target = $region52
        $region51: #{tpu_custom_call.1} parent=11 // pred_region
          _
        $region52: #{tpu_custom_call.1} parent=11 // pred_fallthru
          _
      $region12: #{tpu_custom_call.1} parent=5 // pred_fallthru
        _
      %p460 = scmp.lt.s32.totalorder %s30, 2
      // Predicated region
      $region53: #{tpu_custom_call.1} parent=5 // pred_check
        %p461 = pneg %p460
      $region54: #{tpu_custom_call.1} parent=5 // pred_check_branch
        %463 = sbr.rel (%p461) target = $region56
      $region55: #{tpu_custom_call.1} parent=5 // pred_region
        // Predicated region
        $region57: #{tpu_custom_call.1} parent=55 // pred_check
          %p464 = pneg %p71
        $region58: #{tpu_custom_call.1} parent=55 // pred_check_branch
          %466 = sbr.rel (%p464) target = $region60
        $region59: #{tpu_custom_call.1} parent=55 // pred_region
          %s467 = sand.u32 %s61, 1
          %s468 = scalar_lea.sflag [#allocation9], %s467
          %s469 = sand.u32 %s61, 1
          %s470 = smul.addr %s469, 8
          %s471 = scalar_lea.vmem [#allocation8], %s470
          %473 = vsyncadd %s468, 0
          %s474 = sadd.s32 %s38, %s37
          %s475 = smul.addr %s474, 8
          %s476 = scalar_lea.hbm %s0, %s475
          %s478 = sshll.u32 %s476, 4
          %s479 = int_to_ptr.hbm [resolvable:$true] %s478
          %s480 = sshll.u32 %s471, 4
          %s481 = int_to_ptr.vmem [resolvable:$true] %s480
          %483 = dma.hbm_to_vmem [thread:$0]  %s479, 128, %s481, %s468
        $region60: #{tpu_custom_call.1} parent=55 // pred_fallthru
          _
        // Predicated region
        $region61: #{tpu_custom_call.1} parent=55 // pred_check
          %p484 = pneg %p99
        $region62: #{tpu_custom_call.1} parent=55 // pred_check_branch
          %486 = sbr.rel (%p484) target = $region64
        $region63: #{tpu_custom_call.1} parent=55 // pred_region
          %s487 = sand.u32 %s30, 1
          %s488 = scalar_lea.sflag [#allocation12], %s487
          %s489 = sand.u32 %s89, 1
          %s490 = smul.addr %s489, 8
          %s491 = scalar_lea.vmem [#allocation11], %s490
          %493 = vsyncadd %s488, 0
          %s494 = sadd.s32 %s39, %s37
          %s495 = smul.addr %s494, 8
          %s496 = scalar_lea.hbm %s1, %s495
          %s498 = sshll.u32 %s496, 4
          %s499 = int_to_ptr.hbm [resolvable:$true] %s498
          %s500 = sshll.u32 %s491, 4
          %s501 = int_to_ptr.vmem [resolvable:$true] %s500
          %503 = dma.hbm_to_vmem [thread:$0]  %s499, 128, %s501, %s488
        $region64: #{tpu_custom_call.1} parent=55 // pred_fallthru
          _
        // Predicated region
        $region65: #{tpu_custom_call.1} parent=55 // pred_check
          %p504 = pneg %p127
        $region66: #{tpu_custom_call.1} parent=55 // pred_check_branch
          %506 = sbr.rel (%p504) target = $region68
        $region67: #{tpu_custom_call.1} parent=55 // pred_region
          %s507 = sand.u32 %s30, 1
          %s508 = scalar_lea.sflag [#allocation12], %s507
          %s509 = sand.u32 %s117, 1
          %s510 = smul.addr %s509, 8
          %s511 = scalar_lea.vmem [#allocation13], %s510
          %513 = vsyncadd %s508, 0
          %s514 = sadd.s32 %s39, %s37
          %s515 = smul.addr %s514, 8
          %s516 = scalar_lea.hbm %s2, %s515
          %s518 = sshll.u32 %s516, 4
          %s519 = int_to_ptr.hbm [resolvable:$true] %s518
          %s520 = sshll.u32 %s511, 4
          %s521 = int_to_ptr.vmem [resolvable:$true] %s520
          %523 = dma.hbm_to_vmem [thread:$0]  %s519, 128, %s521, %s508
        $region68: #{tpu_custom_call.1} parent=55 // pred_fallthru
          _
      $region56: #{tpu_custom_call.1} parent=5 // pred_fallthru
        _
      %p524 = scmp.le.s32.totalorder 1, %s30
      %p525 = scmp.lt.s32.totalorder %s30, 3
      %p526 = pnand %p524, %p525
      %p527 = pneg %p526
      // Predicated region
      $region69: #{tpu_custom_call.1} parent=5 // pred_check
        _
      $region70: #{tpu_custom_call.1} parent=5 // pred_check_branch
        %529 = sbr.rel (%p526) target = $region72
      $region71: #{tpu_custom_call.1} parent=5 // pred_region
        %s530 = ssub.s32 %s30, 1
        %s531 = sand.u32 %s64, 1
        %s532 = scalar_lea.sflag [#allocation9], %s531
        %s533 = sand.u32 %s64, 1
        %s534 = smul.addr %s533, 8
        %s535 = scalar_lea.vmem [#allocation8], %s534
        // Predicated region
        $region73: #{tpu_custom_call.1} parent=71 // pred_check
          %p536 = pneg %p77
        $region74: #{tpu_custom_call.1} parent=71 // pred_check_branch
          %538 = sbr.rel (%p536) target = $region76
        $region75: #{tpu_custom_call.1} parent=71 // pred_region
          %540 = dma.done %s532, 128
        $region76: #{tpu_custom_call.1} parent=71 // pred_fallthru
          _
        %s541 = sand.u32 %s35, 1
        %s542 = scalar_lea.sflag [#allocation12], %s541
        %s543 = sand.u32 %s92, 1
        %s544 = smul.addr %s543, 8
        %s545 = scalar_lea.vmem [#allocation11], %s544
        // Predicated region
        $region77: #{tpu_custom_call.1} parent=71 // pred_check
          %p546 = pneg %p105
        $region78: #{tpu_custom_call.1} parent=71 // pred_check_branch
          %548 = sbr.rel (%p546) target = $region80
        $region79: #{tpu_custom_call.1} parent=71 // pred_region
          %550 = dma.done %s542, 128
        $region80: #{tpu_custom_call.1} parent=71 // pred_fallthru
          _
        %s551 = sand.u32 %s35, 1
        %s552 = scalar_lea.sflag [#allocation12], %s551
        %s553 = sand.u32 %s120, 1
        %s554 = smul.addr %s553, 8
        %s555 = scalar_lea.vmem [#allocation13], %s554
        // Predicated region
        $region81: #{tpu_custom_call.1} parent=71 // pred_check
          %p556 = pneg %p133
        $region82: #{tpu_custom_call.1} parent=71 // pred_check_branch
          %558 = sbr.rel (%p556) target = $region84
        $region83: #{tpu_custom_call.1} parent=71 // pred_region
          %560 = dma.done %s552, 128
        $region84: #{tpu_custom_call.1} parent=71 // pred_fallthru
          _
        // Predicated region
        $region85: #{tpu_custom_call.1} parent=71 // pred_check
          %p561 = pneg %p154
        $region86: #{tpu_custom_call.1} parent=71 // pred_check_branch
          %563 = sbr.rel (%p561) target = $region88
        $region87: #{tpu_custom_call.1} parent=71 // pred_region
          %565 = dma.done [#allocation15], 256
        $region88: #{tpu_custom_call.1} parent=71 // pred_fallthru
          _
        // Predicated region
        $region89: #{tpu_custom_call.1} parent=71 // pred_check
          %p566 = pneg %p175
        $region90: #{tpu_custom_call.1} parent=71 // pred_check_branch
          %568 = sbr.rel (%p566) target = $region92
        $region91: #{tpu_custom_call.1} parent=71 // pred_region
          %570 = dma.done [#allocation15], 256
        $region92: #{tpu_custom_call.1} parent=71 // pred_fallthru
          _
        // Predicated region
        $region93: #{tpu_custom_call.1} parent=71 // pred_check
          %p571 = pneg %p196
        $region94: #{tpu_custom_call.1} parent=71 // pred_check_branch
          %573 = sbr.rel (%p571) target = $region96
        $region95: #{tpu_custom_call.1} parent=71 // pred_region
          %575 = dma.done [#allocation18], 256
        $region96: #{tpu_custom_call.1} parent=71 // pred_fallthru
          _
        // Predicated region
        $region97: #{tpu_custom_call.1} parent=71 // pred_check
          %p576 = pneg %p217
        $region98: #{tpu_custom_call.1} parent=71 // pred_check_branch
          %578 = sbr.rel (%p576) target = $region100
        $region99: #{tpu_custom_call.1} parent=71 // pred_region
          %580 = dma.done [#allocation18], 256
        $region100: #{tpu_custom_call.1} parent=71 // pred_fallthru
          _
        %s581 = sand.u32 %s64, 1
        %s582 = scalar_lea.sflag [#allocation9], %s581
        %s583 = sand.u32 %s64, 1
        %s584 = smul.addr %s583, 8
        %s585 = scalar_lea.vmem [#allocation8], %s584
        %p586 = pneg %p77
        %p587 = pneg %p74
        %s588 = sand.u32 %s35, 1
        %s589 = scalar_lea.sflag [#allocation12], %s588
        %s590 = sand.u32 %s92, 1
        %s591 = smul.addr %s590, 8
        %s592 = scalar_lea.vmem [#allocation11], %s591
        %p593 = pneg %p105
        %p594 = pneg %p102
        %s595 = sand.u32 %s35, 1
        %s596 = scalar_lea.sflag [#allocation12], %s595
        %s597 = sand.u32 %s120, 1
        %s598 = smul.addr %s597, 8
        %s599 = scalar_lea.vmem [#allocation13], %s598
        %p600 = pneg %p133
        %p601 = pneg %p130
        %p602 = pneg %p154
        %p603 = pneg %p151
        %p604 = pneg %p175
        %p605 = pneg %p172
        %p606 = pneg %p196
        %p607 = pneg %p193
        %p608 = pneg %p217
        %p609 = pneg %p214
        %p610 = pneg %p238
        %p611 = pneg %p235
        %p612 = pneg %p259
        %p613 = pneg %p256
        %p614 = pneg %p280
        %p615 = pneg %p277
        %p616 = pneg %p301
        %p617 = pneg %p298
        %p618 = pneg %p322
        %p619 = pneg %p319
        %p620 = pneg %p343
        %p621 = pneg %p340
        %p622 = pneg %p371
        %p623 = pneg %p368
        %s624 = sand.u32 %s358, 1
        %s625 = scalar_lea.sflag [#allocation10], %s624
        %s626 = sand.u32 %s358, 1
        %s627 = smul.addr %s626, 8
        %s628 = scalar_lea.vmem [#allocation20], %s627
        %p630 = scmp.eq.s32.totalorder %s42, 0
        // Predicated region
        $region101: #{tpu_custom_call.1} parent=71 // pred_check
          %p631 = pneg %p630
        $region102: #{tpu_custom_call.1} parent=71 // pred_check_branch
          %633 = sbr.rel (%p631) target = $region104
        $region103: #{tpu_custom_call.1} parent=71 // pred_region
          %v634 = vld [vmem:[%s535] sm:$0xff]
          %v635 = vpack.c.bf16 %v634, %v634
          %v636 = vld [vmem:[#allocation14] sm:$0xf]
          %v637 = vld [vmem:[#allocation14 + $0x4] sm:$0xf]
          %v638 = vld [vmem:[#allocation14 + $0x8] sm:$0xf]
          %v639 = vld [vmem:[#allocation14 + $0xc] sm:$0xf]
          %v640 = vld [vmem:[%s7] sm:$0x1]
          %v642 = vperm.slane %v640, 0
          %v648 = vunpack.c.l.b16 %v636
          %v649 = vunpack.c.l.b16 %v637
          %v650 = vunpack.c.l.b16 %v638
          %v651 = vunpack.c.l.b16 %v639
          %v652 = vpack.c.b16 %v649, %v648
          %v653 = vpack.c.b16 %v651, %v650
          %vm656 = vcmask 261120
          %v658 = vsel %vm656, %v635, 0
          %660 = vmatpush.bf16.msra.mxu0 0
          %661 = vmatpush.bf16.msra.mxu0 0
          %662 = vmatpush.bf16.msra.mxu0 0
          %663 = vmatpush.bf16.msra.mxu0 0
          %664 = vmatpush.bf16.msra.mxu0 0
          %665 = vmatpush.bf16.msra.mxu0 0
          %666 = vmatpush.bf16.msra.mxu0 %v653
          %667 = vmatpush.bf16.msra.mxu0 %v652
          %668 = vmatmul.bf16.gmra.mxu0 %v658
          %v669 = vpop.f32.mrf.mxu0
          %v670 = vadd.f32 %v642, %v669
          %v671 = vpop.f32.mrf.mxu0
          %672 = vdwg.mxu0
          %v673 = vmul.f32 %v670, 0.35355338
          %v674 = vpack.c.bf16 %v673, %v673
          %vm675 = vcmask 60416
          %676 = vst.msk [vmem:[#allocation2] sm:$0xf] %vm675, %v674
          %678 = vrot.lane.b32.xlu0 %v674, 120
          %v679 = vpop.permute.xlu0 %678
          %s681 = scalar_lea.vmem [#allocation2], 4
          %682 = vst.msk [vmem:[%s681] sm:$0xf] %vm675, %v679
          %683 = vrot.lane.b32.xlu0 %v674, 112
          %v684 = vpop.permute.xlu0 %683
          %s686 = scalar_lea.vmem [#allocation2], 8
          %687 = vst.msk [vmem:[%s686] sm:$0xf] %vm675, %v684
          %688 = vrot.lane.b32.xlu0 %v674, 104
          %v689 = vpop.permute.xlu0 %688
          %s691 = scalar_lea.vmem [#allocation2], 12
          %692 = vst.msk [vmem:[%s691] sm:$0xf] %vm675, %v689
          %vm693 = vcmask 7168
          %694 = vst.msk [vmem:[#allocation5] sm:$0xff] %vm693, -inf
          %695 = vst.msk [vmem:[#allocation5 + $0x8] sm:$0xff] %vm693, -inf
          %696 = vst.msk [vmem:[#allocation5 + $0x10] sm:$0xff] %vm693, -inf
          %697 = vst.msk [vmem:[#allocation5 + $0x18] sm:$0xff] %vm693, -inf
          %698 = vst.msk [vmem:[#allocation6] sm:$0xff] %vm693, 0.0
          %699 = vst.msk [vmem:[#allocation6 + $0x8] sm:$0xff] %vm693, 0.0
          %700 = vst.msk [vmem:[#allocation6 + $0x10] sm:$0xff] %vm693, 0.0
          %701 = vst.msk [vmem:[#allocation6 + $0x18] sm:$0xff] %vm693, 0.0
          %vm702 = vcmask 64512
          %703 = vst.msk [vmem:[#allocation7] sm:$0xff] %vm702, 0.0
          %704 = vst.msk [vmem:[#allocation7 + $0x8] sm:$0xff] %vm702, 0.0
          %705 = vst.msk [vmem:[#allocation7 + $0x10] sm:$0xff] %vm702, 0.0
          %706 = vst.msk [vmem:[#allocation7 + $0x18] sm:$0xff] %vm702, 0.0
        $region104: #{tpu_custom_call.1} parent=71 // pred_fallthru
          _
        %v707 = vld [vmem:[%s545] sm:$0xff]
        %v708 = vpack.c.bf16 %v707, %v707
        %v709 = vld [vmem:[%s555] sm:$0xff]
        %v710 = vpack.c.bf16 %v709, %v709
        %v711 = vld [vmem:[#allocation16] sm:$0xf]
        %v712 = vld [vmem:[#allocation16 + $0x4] sm:$0xf]
        %v713 = vld [vmem:[#allocation16 + $0x8] sm:$0xf]
        %v714 = vld [vmem:[#allocation16 + $0xc] sm:$0xf]
        %v715 = vld [vmem:[%s8] sm:$0x1]
        %v717 = vperm.slane %v715, 0
        %v723 = vunpack.c.l.b16 %v711
        %v724 = vunpack.c.l.b16 %v712
        %v725 = vunpack.c.l.b16 %v713
        %v726 = vunpack.c.l.b16 %v714
        %v727 = vpack.c.b16 %v724, %v723
        %v728 = vpack.c.b16 %v726, %v725
        %vm731 = vcmask 261120
        %v733 = vsel %vm731, %v708, 0
        %735 = vmatpush.bf16.msra.mxu0 0
        %736 = vmatpush.bf16.msra.mxu0 0
        %737 = vmatpush.bf16.msra.mxu0 0
        %738 = vmatpush.bf16.msra.mxu0 0
        %739 = vmatpush.bf16.msra.mxu0 0
        %740 = vmatpush.bf16.msra.mxu0 0
        %741 = vmatpush.bf16.msra.mxu0 %v728
        %742 = vmatpush.bf16.msra.mxu0 %v727
        %743 = vmatmul.bf16.gmra.mxu0 %v733
        %v744 = vpop.f32.mrf.mxu0
        %v745 = vadd.f32 %v717, %v744
        %v746 = vpop.f32.mrf.mxu0
        %747 = vdwg.mxu0
        %v748 = vpack.c.bf16 %v745, %v745
        %v749 = vld [vmem:[#allocation17] sm:$0xf]
        %v750 = vld [vmem:[#allocation17 + $0x4] sm:$0xf]
        %v751 = vld [vmem:[#allocation17 + $0x8] sm:$0xf]
        %v752 = vld [vmem:[#allocation17 + $0xc] sm:$0xf]
        %v753 = vld [vmem:[%s9] sm:$0x1]
        %v755 = vperm.slane %v753, 0
        %v761 = vunpack.c.l.b16 %v749
        %v762 = vunpack.c.l.b16 %v750
        %v763 = vunpack.c.l.b16 %v751
        %v764 = vunpack.c.l.b16 %v752
        %v765 = vpack.c.b16 %v762, %v761
        %v766 = vpack.c.b16 %v764, %v763
        %v770 = vsel %vm731, %v710, 0
        %772 = vmatpush.bf16.msra.mxu0 0
        %773 = vmatpush.bf16.msra.mxu0 0
        %774 = vmatpush.bf16.msra.mxu0 0
        %775 = vmatpush.bf16.msra.mxu0 0
        %776 = vmatpush.bf16.msra.mxu0 0
        %777 = vmatpush.bf16.msra.mxu0 0
        %778 = vmatpush.bf16.msra.mxu0 %v766
        %779 = vmatpush.bf16.msra.mxu0 %v765
        %780 = vmatmul.bf16.gmra.mxu0 %v770
        %v781 = vpop.f32.mrf.mxu0
        %v782 = vadd.f32 %v755, %v781
        %v783 = vpop.f32.mrf.mxu0
        %784 = vdwg.mxu0
        %v785 = vpack.c.bf16 %v782, %v782
        %vm786 = vcmask 60416
        %787 = vst.msk [vmem:[#allocation3] sm:$0xf] %vm786, %v748
        %788 = vst.msk [vmem:[#allocation4] sm:$0xf] %vm786, %v785
        %790 = vrot.lane.b32.xlu0 %v748, 120
        %v791 = vpop.permute.xlu0 %790
        %s793 = scalar_lea.vmem [#allocation3], 4
        %794 = vst.msk [vmem:[%s793] sm:$0xf] %vm786, %v791
        %796 = vrot.lane.b32.xlu0 %v785, 120
        %v797 = vpop.permute.xlu0 %796
        %s799 = scalar_lea.vmem [#allocation4], 4
        %800 = vst.msk [vmem:[%s799] sm:$0xf] %vm786, %v797
        %801 = vrot.lane.b32.xlu0 %v748, 112
        %v802 = vpop.permute.xlu0 %801
        %s804 = scalar_lea.vmem [#allocation3], 8
        %805 = vst.msk [vmem:[%s804] sm:$0xf] %vm786, %v802
        %806 = vrot.lane.b32.xlu0 %v785, 112
        %v807 = vpop.permute.xlu0 %806
        %s809 = scalar_lea.vmem [#allocation4], 8
        %810 = vst.msk [vmem:[%s809] sm:$0xf] %vm786, %v807
        %811 = vrot.lane.b32.xlu0 %v748, 104
        %v812 = vpop.permute.xlu0 %811
        %s814 = scalar_lea.vmem [#allocation3], 12
        %815 = vst.msk [vmem:[%s814] sm:$0xf] %vm786, %v812
        %816 = vrot.lane.b32.xlu0 %v785, 104
        %v817 = vpop.permute.xlu0 %816
        %s819 = scalar_lea.vmem [#allocation4], 12
        %820 = vst.msk [vmem:[%s819] sm:$0xf] %vm786, %v817
        %v821 = vld [vmem:[#allocation2] sm:$0xf]
        %v822 = vld [vmem:[#allocation2 + $0x4] sm:$0xf]
        %v823 = vld [vmem:[#allocation2 + $0x8] sm:$0xf]
        %v824 = vld [vmem:[#allocation2 + $0xc] sm:$0xf]
        %v825 = vld [vmem:[#allocation3] sm:$0xf]
        %v826 = vld [vmem:[#allocation3 + $0x4] sm:$0xf]
        %v827 = vld [vmem:[#allocation3 + $0x8] sm:$0xf]
        %v828 = vld [vmem:[#allocation3 + $0xc] sm:$0xf]
        %vm829 = vcmask 64512
        %v831 = vsel %vm829, %v821, 0
        %v834 = vsel %vm829, %v825, 0
        %836 = vmatpush.bf16.xpose.msra.mxu0 0
        %837 = vmatpush.bf16.xpose.msra.mxu0 0
        %838 = vmatpush.bf16.xpose.msra.mxu0 0
        %839 = vmatpush.bf16.xpose.msra.mxu0 0
        %840 = vmatpush.bf16.xpose.msra.mxu0 0
        %841 = vmatpush.bf16.xpose.msra.mxu0 0
        %842 = vmatpush.bf16.xpose.msra.mxu0 0
        %843 = vmatpush.bf16.xpose.msra.mxu0 %v834
        %844 = vmatmul.bf16.gmra.mxu0 %v831
        %v845 = vpop.f32.mrf.mxu0
        %v846 = vadd.f32 0.0, %v845
        %v847 = vpop.f32.mrf.mxu0
        %848 = vdwg.mxu0
        %v850 = vsel %vm829, %v822, 0
        %v853 = vsel %vm829, %v826, 0
        %855 = vmatpush.bf16.xpose.msra.mxu0 0
        %856 = vmatpush.bf16.xpose.msra.mxu0 0
        %857 = vmatpush.bf16.xpose.msra.mxu0 0
        %858 = vmatpush.bf16.xpose.msra.mxu0 0
        %859 = vmatpush.bf16.xpose.msra.mxu0 0
        %860 = vmatpush.bf16.xpose.msra.mxu0 0
        %861 = vmatpush.bf16.xpose.msra.mxu0 0
        %862 = vmatpush.bf16.xpose.msra.mxu0 %v853
        %863 = vmatmul.bf16.gmra.mxu0 %v850
        %v864 = vpop.f32.mrf.mxu0
        %v865 = vadd.f32 0.0, %v864
        %v866 = vpop.f32.mrf.mxu0
        %867 = vdwg.mxu0
        %v869 = vsel %vm829, %v823, 0
        %v872 = vsel %vm829, %v827, 0
        %874 = vmatpush.bf16.xpose.msra.mxu0 0
        %875 = vmatpush.bf16.xpose.msra.mxu0 0
        %876 = vmatpush.bf16.xpose.msra.mxu0 0
        %877 = vmatpush.bf16.xpose.msra.mxu0 0
        %878 = vmatpush.bf16.xpose.msra.mxu0 0
        %879 = vmatpush.bf16.xpose.msra.mxu0 0
        %880 = vmatpush.bf16.xpose.msra.mxu0 0
        %881 = vmatpush.bf16.xpose.msra.mxu0 %v872
        %882 = vmatmul.bf16.gmra.mxu0 %v869
        %v883 = vpop.f32.mrf.mxu0
        %v884 = vadd.f32 0.0, %v883
        %v885 = vpop.f32.mrf.mxu0
        %886 = vdwg.mxu0
        %v888 = vsel %vm829, %v824, 0
        %v891 = vsel %vm829, %v828, 0
        %893 = vmatpush.bf16.xpose.msra.mxu0 0
        %894 = vmatpush.bf16.xpose.msra.mxu0 0
        %895 = vmatpush.bf16.xpose.msra.mxu0 0
        %896 = vmatpush.bf16.xpose.msra.mxu0 0
        %897 = vmatpush.bf16.xpose.msra.mxu0 0
        %898 = vmatpush.bf16.xpose.msra.mxu0 0
        %899 = vmatpush.bf16.xpose.msra.mxu0 0
        %900 = vmatpush.bf16.xpose.msra.mxu0 %v891
        %901 = vmatmul.bf16.gmra.mxu0 %v888
        %v902 = vpop.f32.mrf.mxu0
        %v903 = vadd.f32 0.0, %v902
        %v904 = vpop.f32.mrf.mxu0
        %905 = vdwg.mxu0
        %v906 = vld [vmem:[#allocation5] sm:$0xff]
        %v907 = vld [vmem:[#allocation5 + $0x8] sm:$0xff]
        %v908 = vld [vmem:[#allocation5 + $0x10] sm:$0xff]
        %v909 = vld [vmem:[#allocation5 + $0x18] sm:$0xff]
        %v910 = vsel %vm829, %v846, -inf
        %911 = vmax.xlane.f32.xlu0 %v910
        %v912 = vpop.xlane.xlu0 %911
        %v913 = vsel %vm829, %v865, -inf
        %914 = vmax.xlane.f32.xlu0 %v913
        %v915 = vpop.xlane.xlu0 %914
        %v916 = vsel %vm829, %v884, -inf
        %917 = vmax.xlane.f32.xlu0 %v916
        %v918 = vpop.xlane.xlu0 %917
        %v919 = vsel %vm829, %v903, -inf
        %920 = vmax.xlane.f32.xlu0 %v919
        %v921 = vpop.xlane.xlu0 %920
        %v922 = vmax.f32 %v906, %v912
        %v923 = vmax.f32 %v907, %v915
        %v924 = vmax.f32 %v908, %v918
        %v925 = vmax.f32 %v909, %v921
        %v926 = vsub.f32 %v906, %v922
        %v927 = vsub.f32 %v907, %v923
        %v928 = vsub.f32 %v908, %v924
        %v929 = vsub.f32 %v909, %v925
        %v930 = vmul.f32 %v926, 1.442695
        %v931 = vpow.pop %v930
        %v932 = vmul.f32 %v927, 1.442695
        %v933 = vpow.pop %v932
        %v934 = vmul.f32 %v928, 1.442695
        %v935 = vpow.pop %v934
        %v936 = vmul.f32 %v929, 1.442695
        %v937 = vpow.pop %v936
        %939 = vset.pattern.permute.xlu0 0
        %940 = vperm.xlu0 %939, %v922
        %v941 = vpop.permute.xlu0 %940
        %944 = vset.pattern.permute.xlu0 0
        %945 = vperm.xlu0 %944, %v923
        %v946 = vpop.permute.xlu0 %945
        %949 = vset.pattern.permute.xlu0 0
        %950 = vperm.xlu0 %949, %v924
        %v951 = vpop.permute.xlu0 %950
        %954 = vset.pattern.permute.xlu0 0
        %955 = vperm.xlu0 %954, %v925
        %v956 = vpop.permute.xlu0 %955
        %v958 = vsub.f32 %v846, %v941
        %v959 = vsub.f32 %v865, %v946
        %v960 = vsub.f32 %v884, %v951
        %v961 = vsub.f32 %v903, %v956
        %v962 = vmul.f32 %v958, 1.442695
        %v963 = vpow.pop %v962
        %v964 = vmul.f32 %v959, 1.442695
        %v965 = vpow.pop %v964
        %v966 = vmul.f32 %v960, 1.442695
        %v967 = vpow.pop %v966
        %v968 = vmul.f32 %v961, 1.442695
        %v969 = vpow.pop %v968
        %v970 = vld [vmem:[#allocation6] sm:$0xff]
        %v971 = vld [vmem:[#allocation6 + $0x8] sm:$0xff]
        %v972 = vld [vmem:[#allocation6 + $0x10] sm:$0xff]
        %v973 = vld [vmem:[#allocation6 + $0x18] sm:$0xff]
        %v974 = vmul.f32 %v931, %v970
        %v975 = vmul.f32 %v933, %v971
        %v976 = vmul.f32 %v935, %v972
        %v977 = vmul.f32 %v937, %v973
        %v978 = vsel %vm829, %v963, 0.0
        %979 = vadd.xlane.f32.xlu0 %v978
        %v980 = vpop.xlane.xlu0 %979
        %v981 = vsel %vm829, %v965, 0.0
        %982 = vadd.xlane.f32.xlu0 %v981
        %v983 = vpop.xlane.xlu0 %982
        %v984 = vsel %vm829, %v967, 0.0
        %985 = vadd.xlane.f32.xlu0 %v984
        %v986 = vpop.xlane.xlu0 %985
        %v987 = vsel %vm829, %v969, 0.0
        %988 = vadd.xlane.f32.xlu0 %v987
        %v989 = vpop.xlane.xlu0 %988
        %v990 = vadd.f32 %v974, %v980
        %v991 = vadd.f32 %v975, %v983
        %v992 = vadd.f32 %v976, %v986
        %v993 = vadd.f32 %v977, %v989
        %vm994 = vcmask 7168
        %995 = vst.msk [vmem:[#allocation6] sm:$0xff] %vm994, %v990
        %996 = vst.msk [vmem:[#allocation6 + $0x8] sm:$0xff] %vm994, %v991
        %997 = vst.msk [vmem:[#allocation6 + $0x10] sm:$0xff] %vm994, %v992
        %998 = vst.msk [vmem:[#allocation6 + $0x18] sm:$0xff] %vm994, %v993
        %v999 = vld [vmem:[#allocation7] sm:$0xff]
        %v1000 = vld [vmem:[#allocation7 + $0x8] sm:$0xff]
        %v1001 = vld [vmem:[#allocation7 + $0x10] sm:$0xff]
        %v1002 = vld [vmem:[#allocation7 + $0x18] sm:$0xff]
        %1004 = vset.pattern.permute.xlu0 0
        %1005 = vperm.xlu0 %1004, %v931
        %v1006 = vpop.permute.xlu0 %1005
        %1009 = vset.pattern.permute.xlu0 0
        %1010 = vperm.xlu0 %1009, %v933
        %v1011 = vpop.permute.xlu0 %1010
        %1014 = vset.pattern.permute.xlu0 0
        %1015 = vperm.xlu0 %1014, %v935
        %v1016 = vpop.permute.xlu0 %1015
        %1019 = vset.pattern.permute.xlu0 0
        %1020 = vperm.xlu0 %1019, %v937
        %v1021 = vpop.permute.xlu0 %1020
        %v1023 = vmul.f32 %v1006, %v999
        %v1024 = vmul.f32 %v1011, %v1000
        %v1025 = vmul.f32 %v1016, %v1001
        %v1026 = vmul.f32 %v1021, %v1002
        %v1027 = vpack.c.bf16 %v963, %v963
        %v1028 = vpack.c.bf16 %v965, %v965
        %v1029 = vpack.c.bf16 %v967, %v967
        %v1030 = vpack.c.bf16 %v969, %v969
        %v1031 = vld [vmem:[#allocation4] sm:$0xf]
        %v1032 = vld [vmem:[#allocation4 + $0x4] sm:$0xf]
        %v1033 = vld [vmem:[#allocation4 + $0x8] sm:$0xf]
        %v1034 = vld [vmem:[#allocation4 + $0xc] sm:$0xf]
        %v1036 = vsel %vm829, %v1027, 0
        %vm1038 = vcmask 1043456
        %v1040 = vsel %vm1038, %v1031, 0
        %1042 = vmatpush.bf16.msra.mxu0 0
        %1043 = vmatpush.bf16.msra.mxu0 0
        %1044 = vmatpush.bf16.msra.mxu0 0
        %1045 = vmatpush.bf16.msra.mxu0 0
        %1046 = vmatpush.bf16.msra.mxu0 0
        %1047 = vmatpush.bf16.msra.mxu0 0
        %1048 = vmatpush.bf16.msra.mxu0 0
        %1049 = vmatpush.bf16.msra.mxu0 %v1040
        %1050 = vmatmul.bf16.gmra.mxu0 %v1036
        %v1051 = vpop.f32.mrf.mxu0
        %v1052 = vadd.f32 0.0, %v1051
        %v1053 = vpop.f32.mrf.mxu0
        %1054 = vdwg.mxu0
        %v1056 = vsel %vm829, %v1028, 0
        %v1059 = vsel %vm1038, %v1032, 0
        %1061 = vmatpush.bf16.msra.mxu0 0
        %1062 = vmatpush.bf16.msra.mxu0 0
        %1063 = vmatpush.bf16.msra.mxu0 0
        %1064 = vmatpush.bf16.msra.mxu0 0
        %1065 = vmatpush.bf16.msra.mxu0 0
        %1066 = vmatpush.bf16.msra.mxu0 0
        %1067 = vmatpush.bf16.msra.mxu0 0
        %1068 = vmatpush.bf16.msra.mxu0 %v1059
        %1069 = vmatmul.bf16.gmra.mxu0 %v1056
        %v1070 = vpop.f32.mrf.mxu0
        %v1071 = vadd.f32 0.0, %v1070
        %v1072 = vpop.f32.mrf.mxu0
        %1073 = vdwg.mxu0
        %v1075 = vsel %vm829, %v1029, 0
        %v1078 = vsel %vm1038, %v1033, 0
        %1080 = vmatpush.bf16.msra.mxu0 0
        %1081 = vmatpush.bf16.msra.mxu0 0
        %1082 = vmatpush.bf16.msra.mxu0 0
        %1083 = vmatpush.bf16.msra.mxu0 0
        %1084 = vmatpush.bf16.msra.mxu0 0
        %1085 = vmatpush.bf16.msra.mxu0 0
        %1086 = vmatpush.bf16.msra.mxu0 0
        %1087 = vmatpush.bf16.msra.mxu0 %v1078
        %1088 = vmatmul.bf16.gmra.mxu0 %v1075
        %v1089 = vpop.f32.mrf.mxu0
        %v1090 = vadd.f32 0.0, %v1089
        %v1091 = vpop.f32.mrf.mxu0
        %1092 = vdwg.mxu0
        %v1094 = vsel %vm829, %v1030, 0
        %v1097 = vsel %vm1038, %v1034, 0
        %1099 = vmatpush.bf16.msra.mxu0 0
        %1100 = vmatpush.bf16.msra.mxu0 0
        %1101 = vmatpush.bf16.msra.mxu0 0
        %1102 = vmatpush.bf16.msra.mxu0 0
        %1103 = vmatpush.bf16.msra.mxu0 0
        %1104 = vmatpush.bf16.msra.mxu0 0
        %1105 = vmatpush.bf16.msra.mxu0 0
        %1106 = vmatpush.bf16.msra.mxu0 %v1097
        %1107 = vmatmul.bf16.gmra.mxu0 %v1094
        %v1108 = vpop.f32.mrf.mxu0
        %v1109 = vadd.f32 0.0, %v1108
        %v1110 = vpop.f32.mrf.mxu0
        %1111 = vdwg.mxu0
        %v1112 = vadd.f32 %v1023, %v1052
        %v1113 = vadd.f32 %v1024, %v1071
        %v1114 = vadd.f32 %v1025, %v1090
        %v1115 = vadd.f32 %v1026, %v1109
        %1116 = vst.msk [vmem:[#allocation7] sm:$0xff] %vm829, %v1112
        %1117 = vst.msk [vmem:[#allocation7 + $0x8] sm:$0xff] %vm829, %v1113
        %1118 = vst.msk [vmem:[#allocation7 + $0x10] sm:$0xff] %vm829, %v1114
        %1119 = vst.msk [vmem:[#allocation7 + $0x18] sm:$0xff] %vm829, %v1115
        %1120 = vst.msk [vmem:[#allocation5] sm:$0xff] %vm994, %v922
        %1121 = vst.msk [vmem:[#allocation5 + $0x8] sm:$0xff] %vm994, %v923
        %1122 = vst.msk [vmem:[#allocation5 + $0x10] sm:$0xff] %vm994, %v924
        %1123 = vst.msk [vmem:[#allocation5 + $0x18] sm:$0xff] %vm994, %v925
        // Predicated region
        $region105: #{tpu_custom_call.1} parent=71 // pred_check
          %p1124 = pneg %p630
        $region106: #{tpu_custom_call.1} parent=71 // pred_check_branch
          %1126 = sbr.rel (%p1124) target = $region108
        $region107: #{tpu_custom_call.1} parent=71 // pred_region
          %v1127 = vld [vmem:[#allocation6] sm:$0xff]
          %v1128 = vld [vmem:[#allocation6 + $0x8] sm:$0xff]
          %v1129 = vld [vmem:[#allocation6 + $0x10] sm:$0xff]
          %v1130 = vld [vmem:[#allocation6 + $0x18] sm:$0xff]
          %v1131 = vrcp.pop %v1127
          %v1132 = vrcp.pop %v1128
          %v1133 = vrcp.pop %v1129
          %v1134 = vrcp.pop %v1130
          %v1135 = vld [vmem:[#allocation7] sm:$0xff]
          %v1136 = vld [vmem:[#allocation7 + $0x8] sm:$0xff]
          %v1137 = vld [vmem:[#allocation7 + $0x10] sm:$0xff]
          %v1138 = vld [vmem:[#allocation7 + $0x18] sm:$0xff]
          %1140 = vset.pattern.permute.xlu0 0
          %1141 = vperm.xlu0 %1140, %v1131
          %v1142 = vpop.permute.xlu0 %1141
          %1145 = vset.pattern.permute.xlu0 0
          %1146 = vperm.xlu0 %1145, %v1132
          %v1147 = vpop.permute.xlu0 %1146
          %1150 = vset.pattern.permute.xlu0 0
          %1151 = vperm.xlu0 %1150, %v1133
          %v1152 = vpop.permute.xlu0 %1151
          %1155 = vset.pattern.permute.xlu0 0
          %1156 = vperm.xlu0 %1155, %v1134
          %v1157 = vpop.permute.xlu0 %1156
          %v1159 = vmul.f32 %v1135, %v1142
          %v1160 = vmul.f32 %v1136, %v1147
          %v1161 = vmul.f32 %v1137, %v1152
          %v1162 = vmul.f32 %v1138, %v1157
          %v1163 = vpack.c.bf16 %v1159, %v1159
          %v1164 = vpack.c.bf16 %v1160, %v1160
          %v1165 = vpack.c.bf16 %v1161, %v1161
          %v1166 = vpack.c.bf16 %v1162, %v1162
          %v1167 = vld [vmem:[%s10] sm:$0x1]
          %v1168 = vld [vmem:[#allocation19] sm:$0xf]
          %v1170 = vsel %vm829, %v1163, 0
          %v1173 = vsel %vm1038, %v1168, 0
          %1175 = vmatpush.bf16.msra.mxu0 0
          %1176 = vmatpush.bf16.msra.mxu0 0
          %1177 = vmatpush.bf16.msra.mxu0 0
          %1178 = vmatpush.bf16.msra.mxu0 0
          %1179 = vmatpush.bf16.msra.mxu0 0
          %1180 = vmatpush.bf16.msra.mxu0 0
          %1181 = vmatpush.bf16.msra.mxu0 0
          %1182 = vmatpush.bf16.msra.mxu0 %v1173
          %1183 = vmatmul.bf16.gmra.mxu0 %v1170
          %v1184 = vpop.f32.mrf.mxu0
          %v1185 = vadd.f32 0.0, %v1184
          %v1186 = vpop.f32.mrf.mxu0
          %1187 = vdwg.mxu0
          %v1189 = vperm.slane %v1167, 0
          %v1191 = vadd.f32 %v1189, %v1185
          %s1192 = scalar_lea.vmem [#allocation19], 4
          %v1193 = vld [vmem:[%s1192] sm:$0xf]
          %v1195 = vsel %vm829, %v1164, 0
          %v1198 = vsel %vm1038, %v1193, 0
          %1200 = vmatpush.bf16.msra.mxu0 0
          %1201 = vmatpush.bf16.msra.mxu0 0
          %1202 = vmatpush.bf16.msra.mxu0 0
          %1203 = vmatpush.bf16.msra.mxu0 0
          %1204 = vmatpush.bf16.msra.mxu0 0
          %1205 = vmatpush.bf16.msra.mxu0 0
          %1206 = vmatpush.bf16.msra.mxu0 0
          %1207 = vmatpush.bf16.msra.mxu0 %v1198
          %1208 = vmatmul.bf16.gmra.mxu0 %v1195
          %v1209 = vpop.f32.mrf.mxu0
          %v1210 = vadd.f32 0.0, %v1209
          %v1211 = vpop.f32.mrf.mxu0
          %1212 = vdwg.mxu0
          %v1213 = vadd.f32 %v1191, %v1210
          %s1214 = scalar_lea.vmem [#allocation19], 8
          %v1215 = vld [vmem:[%s1214] sm:$0xf]
          %v1217 = vsel %vm829, %v1165, 0
          %v1220 = vsel %vm1038, %v1215, 0
          %1222 = vmatpush.bf16.msra.mxu0 0
          %1223 = vmatpush.bf16.msra.mxu0 0
          %1224 = vmatpush.bf16.msra.mxu0 0
          %1225 = vmatpush.bf16.msra.mxu0 0
          %1226 = vmatpush.bf16.msra.mxu0 0
          %1227 = vmatpush.bf16.msra.mxu0 0
          %1228 = vmatpush.bf16.msra.mxu0 0
          %1229 = vmatpush.bf16.msra.mxu0 %v1220
          %1230 = vmatmul.bf16.gmra.mxu0 %v1217
          %v1231 = vpop.f32.mrf.mxu0
          %v1232 = vadd.f32 0.0, %v1231
          %v1233 = vpop.f32.mrf.mxu0
          %1234 = vdwg.mxu0
          %v1235 = vadd.f32 %v1213, %v1232
          %s1236 = scalar_lea.vmem [#allocation19], 12
          %v1237 = vld [vmem:[%s1236] sm:$0xf]
          %v1239 = vsel %vm829, %v1166, 0
          %v1242 = vsel %vm1038, %v1237, 0
          %1244 = vmatpush.bf16.msra.mxu0 0
          %1245 = vmatpush.bf16.msra.mxu0 0
          %1246 = vmatpush.bf16.msra.mxu0 0
          %1247 = vmatpush.bf16.msra.mxu0 0
          %1248 = vmatpush.bf16.msra.mxu0 0
          %1249 = vmatpush.bf16.msra.mxu0 0
          %1250 = vmatpush.bf16.msra.mxu0 0
          %1251 = vmatpush.bf16.msra.mxu0 %v1242
          %1252 = vmatmul.bf16.gmra.mxu0 %v1239
          %v1253 = vpop.f32.mrf.mxu0
          %v1254 = vadd.f32 0.0, %v1253
          %v1255 = vpop.f32.mrf.mxu0
          %1256 = vdwg.mxu0
          %v1257 = vadd.f32 %v1235, %v1254
          %v1258 = vld [vmem:[%s535] sm:$0xff]
          %v1259 = vadd.f32 %v1258, %v1257
          %v1260 = vsel %vm731, %v1259, 0.0
          %1261 = vadd.xlane.f32.xlu0 %v1260
          %v1262 = vpop.xlane.xlu0 %1261
          %v1263 = vrcp.pop 32.0
          %v1264 = vmul.f32 32.0, %v1263
          %v1265 = vsub.f32 1.0, %v1264
          %v1266 = vmul.f32 %v1263, %v1265
          %v1267 = vadd.f32 %v1263, %v1266
          %vm1268 = vweird.f32 %v1263
          %v1269 = vsel %vm1268, %v1263, %v1267
          %v1270 = vmul.f32 %v1262, %v1269
          %v1271 = vsub.f32 %v1259, %v1270
          %v1272 = vmul.f32 %v1271, %v1271
          %v1273 = vsel %vm731, %v1272, 0.0
          %1274 = vadd.xlane.f32.xlu0 %v1273
          %v1275 = vpop.xlane.xlu0 %1274
          %v1276 = vmul.f32 %v1275, %v1269
          %v1277 = vadd.f32 %v1276, 1e-05
          %v1278 = vrsqrt.pop %v1277
          %v1279 = vmul.f32 %v1278, %v1277
          %v1280 = vmul.f32 %v1279, %v1278
          %v1281 = vmul.f32 0.5, %v1280
          %v1282 = vsub.f32 1.5, %v1281
          %v1283 = vmul.f32 %v1278, %v1282
          %vm1284 = vweird.f32 %v1277
          %vm1285 = vweird.f32 %v1278
          %vm1286 = vmor %vm1284, %vm1285
          %v1287 = vsel %vm1286, %v1278, %v1283
          %v1288 = vmul.f32 %v1271, %v1287
          %v1289 = vld [vmem:[%s11] sm:$0x1]
          %v1291 = vperm.slane %v1289, 0
          %v1293 = vmul.f32 %v1288, %v1291
          %v1294 = vld [vmem:[%s12] sm:$0x1]
          %v1296 = vperm.slane %v1294, 0
          %v1298 = vadd.f32 %v1293, %v1296
          %1299 = vst.msk [vmem:[%s628] sm:$0xff] %vm731, %v1298
        $region108: #{tpu_custom_call.1} parent=71 // pred_fallthru
          _
        %s1300 = sand.u32 %s358, 1
        %s1301 = scalar_lea.sflag [#allocation10], %s1300
        %s1302 = sand.u32 %s358, 1
        %s1303 = smul.addr %s1302, 8
        %s1304 = scalar_lea.vmem [#allocation20], %s1303
        // Predicated region
        $region109: #{tpu_custom_call.1} parent=71 // pred_check
          %p1305 = pneg %p368
        $region110: #{tpu_custom_call.1} parent=71 // pred_check_branch
          %1307 = sbr.rel (%p1305) target = $region112
        $region111: #{tpu_custom_call.1} parent=71 // pred_region
          %1309 = vsyncadd %s1301, 0
          %s1310 = sadd.s32 %s41, %s40
          %s1311 = smul.addr %s1310, 8
          %s1312 = scalar_lea.hbm %s13, %s1311
          %s1314 = sshll.u32 %s1304, 4
          %s1315 = int_to_ptr.vmem [resolvable:$true] %s1314
          %s1316 = sshll.u32 %s1312, 4
          %s1317 = int_to_ptr.hbm [resolvable:$true] %s1316
          %1319 = dma.vmem_to_hbm [thread:$0]  %s1315, 128, %s1317, %s1301
        $region112: #{tpu_custom_call.1} parent=71 // pred_fallthru
          _
      $region72: #{tpu_custom_call.1} parent=5 // pred_fallthru
        _
      %p1320 = scmp.le.s32.totalorder 2, %s30
      // Predicated region
      $region113: #{tpu_custom_call.1} parent=5 // pred_check
        %p1321 = pneg %p1320
      $region114: #{tpu_custom_call.1} parent=5 // pred_check_branch
        %1323 = sbr.rel (%p1321) target = $region116
      $region115: #{tpu_custom_call.1} parent=5 // pred_region
        %s1324 = ssub.s32 %s30, 2
        // Predicated region
        $region117: #{tpu_custom_call.1} parent=115 // pred_check
          %p1325 = pneg %p374
        $region118: #{tpu_custom_call.1} parent=115 // pred_check_branch
          %1327 = sbr.rel (%p1325) target = $region120
        $region119: #{tpu_custom_call.1} parent=115 // pred_region
          %s1328 = sand.u32 %s359, 1
          %s1329 = scalar_lea.sflag [#allocation10], %s1328
          %s1330 = sand.u32 %s359, 1
          %s1331 = smul.addr %s1330, 8
          %s1332 = scalar_lea.vmem [#allocation20], %s1331
          %1334 = dma.done %s1329, 128
        $region120: #{tpu_custom_call.1} parent=115 // pred_fallthru
          _
      $region116: #{tpu_custom_call.1} parent=5 // pred_fallthru
        _
    $region6: #{tpu_custom_call.1} parent=1 // loop_footer
      %s34 = sadd.s32 1, %s30
    $region7: #{tpu_custom_call.1} parent=1 // loop_footer_branch
      %29 = sbr.rel target = $region3
    $region8: #{tpu_custom_call.1} parent=1 // loop_exit
      _
    %1335 = vsyncpa [#allocation9], 1
    %s1336 = scalar_lea.sflag [#allocation9], 1
    %1337 = vsyncpa %s1336, 1
    %1338 = vsyncpa [#allocation12], 1
    %s1339 = scalar_lea.sflag [#allocation12], 1
    %1340 = vsyncpa %s1339, 1
    %1341 = vsyncpa [#allocation15], 1
    %1342 = vsyncpa [#allocation18], 1
    %1343 = vsyncpa [#allocation10], 1
    %s1344 = scalar_lea.sflag [#allocation10], 1
    %1345 = vsyncpa %s1344, 1

</llo_original>
